<compile_context>
chip_gen: v7x
topology: tpu7x:2x2x1
jax: 0.10.0
libtpu: 0.0.40
codegen_flags: <defaults>
</compile_context>

<pallas_src>
import numpy as np
import jax
import jax.numpy as jnp
from jax.experimental import pallas as pl
from jax.experimental.pallas import tpu as pltpu

B, L, D, DFF = 2, 8, 32, 64
LD = L * D          # 256  (flattened token*feature width)
LDFF = L * DFF      # 512
LN_EPS = 1e-5


def _gelu_tanh(h):
    # TODO(synk): PyTorch nn.GELU() default is the exact erf form; erf lowering is
    # not guaranteed in Mosaic, so the tanh approximation is used here.
    return 0.5 * h * (1.0 + jnp.tanh(0.7978845608028654 * (h + 0.044715 * h * h * h)))


def _layernorm_ref(v, gamma, beta):
    mu = jnp.mean(v, axis=-1, keepdims=True)
    var = jnp.mean((v - mu) ** 2, axis=-1, keepdims=True)
    return (v - mu) * jax.lax.rsqrt(var + LN_EPS) * gamma + beta


def encoder_layer_kernel(x_ref, m_ref, a_ref, w1_ref, b1_ref, w2_ref, vecs_ref,
                         o_ref):
    x = x_ref[...]                                    # (TM, L*D) f32, lane-dense
    a_bf = a_ref[...]                                 # (L*D, L*D) bf16 segment-averaging op
    rows = x.shape[0]

    vecs = vecs_ref[...]                              # (5, L*D) f32
    g0, be0 = vecs[0:1, :], vecs[1:2, :]
    g1, be1 = vecs[2:3, :], vecs[3:4, :]
    bias2 = vecs[4:5, :]

    def seg_layernorm(v, gamma, beta):
        # Per-token (per 32-lane segment) LayerNorm, reshape-free.  ONE bf16 stat
        # matmul: stack [v ; v*v] along the sublane axis and hit the block-diagonal
        # averaging operator once -> [mu ; E[v^2]] already broadcast per segment.
        stacked = jnp.concatenate([v, v * v], axis=0).astype(jnp.bfloat16)
        stats = jnp.dot(stacked, a_bf, preferred_element_type=jnp.float32)
        mu = stats[:rows, :]
        ex2 = stats[rows:, :]
        var = ex2 - mu * mu                           # f32 (cancellation-safe path)
        return (v - mu) * jax.lax.rsqrt(var + LN_EPS) * gamma + beta

    # --- "attention": real 2D DFT as ONE (TM,256)@(256,256) bf16 matmul --------
    f = jnp.dot(x.astype(jnp.bfloat16), m_ref[...],
                preferred_element_type=jnp.float32)   # (TM, L*D) f32

    # --- residual branch 1: LayerNorm0 + skip ---------------------------------
    out1 = seg_layernorm(f, g0, be0) + x              # (TM, L*D)

    # --- feed forward: block-diagonal Linear -> GELU -> Linear ----------------
    h = jnp.dot(out1.astype(jnp.bfloat16), w1_ref[...],
                preferred_element_type=jnp.float32) + b1_ref[...]   # (TM, L*DFF)
    h = _gelu_tanh(h)
    ff = jnp.dot(h.astype(jnp.bfloat16), w2_ref[...],
                 preferred_element_type=jnp.float32) + bias2        # (TM, L*D)

    # --- residual branch 2: LayerNorm1 + skip ---------------------------------
    out = seg_layernorm(ff, g1, be1) + out1
    o_ref[...] = out.astype(o_ref.dtype)              # lane-dense (TM, 256) store


def encoder_layer(x, ops, *, row_tile=128):
    """x: (rows, L, D) -- any number of stacked windows/batches in one call."""
    m, a, w1bd, b1f, w2bd, vecs = ops
    rows = x.shape[0]
    x_flat = x.reshape(rows, LD)                      # wrapper-side reshape (free)

    # Row tile: 128 when enough rows, otherwise the smallest sublane-aligned tile.
    tm = min(row_tile, ((rows + 7) // 8) * 8)
    rows_p = ((rows + tm - 1) // tm) * tm
    if rows_p != rows:
        x_flat = jnp.pad(x_flat, ((0, rows_p - rows), (0, 0)))

    pinned = lambda i: (0, 0)                         # operators: DMA once, stay resident
    op_bytes = sum(int(o.size) * o.dtype.itemsize for o in (m, a, w1bd, b1f, w2bd, vecs))
    cost = pl.CostEstimate(
        # DFT + 2x (stacked LN stat dot) + FFN1 + FFN2
        flops=2 * rows_p * LD * (LD + 4 * LD + 2 * LDFF),
        transcendentals=rows_p * LDFF,                # tanh in GELU
        bytes_accessed=2 * rows_p * LD * 4 + op_bytes,
    )

    out_flat = pl.pallas_call(
        encoder_layer_kernel,
        out_shape=jax.ShapeDtypeStruct((rows_p, LD), jnp.float32),
        grid=(rows_p // tm,),
        in_specs=[
            pl.BlockSpec((tm, LD), lambda i: (i, 0)),  # x row tile, f32 (streamed)
            pl.BlockSpec((LD, LD), pinned),            # M   (composed real-2D-DFT), bf16
            pl.BlockSpec((LD, LD), pinned),            # A   (segment averaging),    bf16
            pl.BlockSpec((LD, LDFF), pinned),          # kron(I_L, W1),              bf16
            pl.BlockSpec((1, LDFF), pinned),           # bias1 tiled,                f32
            pl.BlockSpec((LDFF, LD), pinned),          # kron(I_L, W2),              bf16
            pl.BlockSpec((5, LD), pinned),             # [g0; b0; g1; b1; bias2] tiled, f32
        ],
        out_specs=pl.BlockSpec((tm, LD), lambda i: (i, 0)),
        compiler_params=pltpu.CompilerParams(
            dimension_semantics=("parallel",)),        # row tiles shard across TCs on v7x
        cost_estimate=cost,
    )(x_flat, m, a, w1bd, b1f, w2bd, vecs)
    return out_flat[:rows].reshape(rows, L, D)


def make_model_params(key):
    # Matches the module __init__: FFN weights xavier_uniform_, all 1-D params
    # zeroed; LayerNorm weight/bias keep the PyTorch defaults (1 / 0).
    def xavier(k, fan_out, fan_in):
        bound = float(np.sqrt(6.0 / (fan_in + fan_out)))
        w = jax.random.uniform(k, (fan_out, fan_in), jnp.float32, -bound, bound)
        return w.T                                    # (in, out): y = x @ W

    k1, k2 = jax.random.split(key)
    return dict(
        w1=xavier(k1, DFF, D),                        # (D, DFF)
        b1=jnp.zeros((DFF,), jnp.float32),
        w2=xavier(k2, D, DFF),                        # (DFF, D)
        b2=jnp.zeros((D,), jnp.float32),
        g0=jnp.ones((D,), jnp.float32),
        be0=jnp.zeros((D,), jnp.float32),
        g1=jnp.ones((D,), jnp.float32),
        be1=jnp.zeros((D,), jnp.float32),
    )


def pack_kernel_operands(p):
    # Composed real-2D-DFT operator:  Re(FFT2(x))_flat = x_flat @ M,
    # M = kron(C_L, C_D) - kron(S_L, S_D), entries cos(2*pi*(l*l'/L + d*d'/D)).
    l = np.arange(L)
    d = np.arange(D)
    CL = np.cos(2.0 * np.pi * np.outer(l, l) / L)
    SL = np.sin(2.0 * np.pi * np.outer(l, l) / L)
    CD = np.cos(2.0 * np.pi * np.outer(d, d) / D)
    SD = np.sin(2.0 * np.pi * np.outer(d, d) / D)
    M = (np.kron(CL, CD) - np.kron(SL, SD)).astype(np.float32)      # (256, 256)

    # Block-diagonal segment-averaging operator (per-token LayerNorm stats).
    # Entries are 0 and 1/32 = 2^-5 -> exactly representable in bf16.
    A = np.kron(np.eye(L), np.full((D, D), 1.0 / D)).astype(np.float32)

    eye = np.eye(L, dtype=np.float32)
    W1bd = np.kron(eye, np.asarray(p["w1"], np.float32))            # (256, 512)
    W2bd = np.kron(eye, np.asarray(p["w2"], np.float32))            # (512, 256)
    b1f = np.tile(np.asarray(p["b1"], np.float32), L)[None, :]      # (1, 512)
    vecs = np.stack([np.tile(np.asarray(p[k], np.float32), L)
                     for k in ("g0", "be0", "g1", "be1", "b2")])    # (5, 256)

    return (jnp.asarray(M, jnp.bfloat16),
            jnp.asarray(A, jnp.bfloat16),
            jnp.asarray(W1bd, jnp.bfloat16),
            jnp.asarray(b1f, jnp.float32),
            jnp.asarray(W2bd, jnp.bfloat16),
            jnp.asarray(vecs, jnp.float32))


def ref_encoder_layer(x, p):
    f = jnp.real(jnp.fft.fft(jnp.fft.fft(x, axis=-1), axis=-2)).astype(jnp.float32)
    out1 = _layernorm_ref(f, p["g0"], p["be0"]) + x
    h = _gelu_tanh(out1 @ p["w1"] + p["b1"])
    ff = h @ p["w2"] + p["b2"]
    return _layernorm_ref(ff, p["g1"], p["be1"]) + out1


if __name__ == "__main__":
    params = make_model_params(jax.random.PRNGKey(42))
    ops = pack_kernel_operands(params)

    # 1) Module-nominal small shape (batch=2, seq=8, d_model=32): single grid step.
    x_small = jax.random.normal(jax.random.PRNGKey(0), (B, L, D), jnp.float32)
    out_small = jax.block_until_ready(encoder_layer(x_small, ops))
    ref_small = ref_encoder_layer(x_small, params)
    assert out_small.shape == (B, L, D)
    assert bool(jnp.all(jnp.isfinite(out_small)))
    # bf16 matmul operands (f32 accumulation) vs an all-f32 FFT reference.
    np.testing.assert_allclose(np.asarray(out_small), np.asarray(ref_small),
                               rtol=2e-2, atol=5e-2)

    # 2) Batched-rows path (the main perf lever from the review): many stacked
    #    windows in ONE pallas_call; 128-row tiles, operators pinned/VMEM-resident
    #    across grid steps, rows padded 200 -> 256 (grid = (2,)).
    n_big = 200
    x_big = jax.random.normal(jax.random.PRNGKey(1), (n_big, L, D), jnp.float32)
    out_big = jax.block_until_ready(encoder_layer(x_big, ops))
    ref_big = ref_encoder_layer(x_big, params)
    assert out_big.shape == (n_big, L, D)
    assert bool(jnp.all(jnp.isfinite(out_big)))
    np.testing.assert_allclose(np.asarray(out_big), np.asarray(ref_big),
                               rtol=2e-2, atol=5e-2)

    print("KERNEL_OK")
</pallas_src>

<mosaic_0001>
module attributes {stable_mosaic.version = 11 : i64} {
  func.func @encoder_layer_kernel(%arg0: i32, %arg1: memref<8x256xf32, #tpu.memory_space<vmem>>, %arg2: memref<256x256xbf16, #tpu.memory_space<vmem>>, %arg3: memref<256x256xbf16, #tpu.memory_space<vmem>>, %arg4: memref<256x512xbf16, #tpu.memory_space<vmem>>, %arg5: memref<1x512xf32, #tpu.memory_space<vmem>>, %arg6: memref<512x256xbf16, #tpu.memory_space<vmem>>, %arg7: memref<5x256xf32, #tpu.memory_space<vmem>>, %arg8: memref<8x256xf32, #tpu.memory_space<vmem>>) attributes {dimension_semantics = [#tpu.dimension_semantics<parallel>], iteration_bounds = array<i64: 1>, scalar_prefetch = 0 : i64, scratch_operands = 0 : i64, tpu.core_type = #tpu.core_type<tc>, window_params = [{transform_indices = @transform_0, window_bounds = array<i64: 8, 256>}, {pipeline_mode = #tpu.pipeline_mode<synchronous>, transform_indices = @transform_1, window_bounds = array<i64: 256, 256>}, {pipeline_mode = #tpu.pipeline_mode<synchronous>, transform_indices = @transform_2, window_bounds = array<i64: 256, 256>}, {pipeline_mode = #tpu.pipeline_mode<synchronous>, transform_indices = @transform_3, window_bounds = array<i64: 256, 512>}, {pipeline_mode = #tpu.pipeline_mode<synchronous>, transform_indices = @transform_4, window_bounds = array<i64: 1, 512>}, {pipeline_mode = #tpu.pipeline_mode<synchronous>, transform_indices = @transform_5, window_bounds = array<i64: 512, 256>}, {pipeline_mode = #tpu.pipeline_mode<synchronous>, transform_indices = @transform_6, window_bounds = array<i64: 5, 256>}, {transform_indices = @transform_7, window_bounds = array<i64: 8, 256>}]} {
    %c0 = arith.constant 0 : index
    %c0_0 = arith.constant 0 : index
    %0 = vector.load %arg1[%c0, %c0_0] : memref<8x256xf32, #tpu.memory_space<vmem>>, vector<8x256xf32>
    %c0_1 = arith.constant 0 : index
    %c0_2 = arith.constant 0 : index
    %1 = vector.load %arg3[%c0_1, %c0_2] : memref<256x256xbf16, #tpu.memory_space<vmem>>, vector<256x256xbf16>
    %c0_3 = arith.constant 0 : index
    %c0_4 = arith.constant 0 : index
    %2 = vector.load %arg7[%c0_3, %c0_4] : memref<5x256xf32, #tpu.memory_space<vmem>>, vector<5x256xf32>
    %3 = vector.extract_strided_slice %2 {offsets = [0, 0], sizes = [1, 256], strides = [1, 1]} : vector<5x256xf32> to vector<1x256xf32>
    %4 = vector.extract_strided_slice %2 {offsets = [1, 0], sizes = [1, 256], strides = [1, 1]} : vector<5x256xf32> to vector<1x256xf32>
    %5 = vector.extract_strided_slice %2 {offsets = [2, 0], sizes = [1, 256], strides = [1, 1]} : vector<5x256xf32> to vector<1x256xf32>
    %6 = vector.extract_strided_slice %2 {offsets = [3, 0], sizes = [1, 256], strides = [1, 1]} : vector<5x256xf32> to vector<1x256xf32>
    %7 = vector.extract_strided_slice %2 {offsets = [4, 0], sizes = [1, 256], strides = [1, 1]} : vector<5x256xf32> to vector<1x256xf32>
    %8 = arith.truncf %0 : vector<8x256xf32> to vector<8x256xbf16>
    %c0_5 = arith.constant 0 : index
    %c0_6 = arith.constant 0 : index
    %9 = vector.load %arg2[%c0_5, %c0_6] : memref<256x256xbf16, #tpu.memory_space<vmem>>, vector<256x256xbf16>
    %cst = arith.constant dense<0.000000e+00> : vector<8x256xf32>
    %10 = tpu.matmul %8, %9, %cst {dimension_numbers = #tpu.dot_dimension_numbers<[1], [0], [0], [1], [0, 0, 1, 1], [], []>} : vector<8x256xbf16>, vector<256x256xbf16>, vector<8x256xf32> -> vector<8x256xf32>
    %11 = arith.mulf %10, %10 : vector<8x256xf32>
    %12 = tpu.concatenate %10, %11 in 0 : vector<8x256xf32>, vector<8x256xf32> -> vector<16x256xf32>
    %13 = arith.truncf %12 : vector<16x256xf32> to vector<16x256xbf16>
    %cst_7 = arith.constant dense<0.000000e+00> : vector<16x256xf32>
    %14 = tpu.matmul %13, %1, %cst_7 {dimension_numbers = #tpu.dot_dimension_numbers<[1], [0], [0], [1], [0, 0, 1, 1], [], []>} : vector<16x256xbf16>, vector<256x256xbf16>, vector<16x256xf32> -> vector<16x256xf32>
    %15 = vector.extract_strided_slice %14 {offsets = [0, 0], sizes = [8, 256], strides = [1, 1]} : vector<16x256xf32> to vector<8x256xf32>
    %16 = vector.extract_strided_slice %14 {offsets = [8, 0], sizes = [8, 256], strides = [1, 1]} : vector<16x256xf32> to vector<8x256xf32>
    %17 = arith.mulf %15, %15 : vector<8x256xf32>
    %18 = arith.subf %16, %17 : vector<8x256xf32>
    %19 = arith.subf %10, %15 : vector<8x256xf32>
    %cst_8 = arith.constant 9.99999974E-6 : f32
    %20 = vector.broadcast %cst_8 : f32 to vector<8x256xf32>
    %21 = arith.addf %18, %20 : vector<8x256xf32>
    %22 = math.rsqrt %21 : vector<8x256xf32>
    %23 = arith.mulf %19, %22 : vector<8x256xf32>
    %24 = vector.broadcast %3 : vector<1x256xf32> to vector<8x256xf32>
    %25 = arith.mulf %23, %24 : vector<8x256xf32>
    %26 = vector.broadcast %4 : vector<1x256xf32> to vector<8x256xf32>
    %27 = arith.addf %25, %26 : vector<8x256xf32>
    %28 = arith.addf %27, %0 : vector<8x256xf32>
    %29 = arith.truncf %28 : vector<8x256xf32> to vector<8x256xbf16>
    %c0_9 = arith.constant 0 : index
    %c0_10 = arith.constant 0 : index
    %30 = vector.load %arg4[%c0_9, %c0_10] : memref<256x512xbf16, #tpu.memory_space<vmem>>, vector<256x512xbf16>
    %cst_11 = arith.constant dense<0.000000e+00> : vector<8x512xf32>
    %31 = tpu.matmul %29, %30, %cst_11 {dimension_numbers = #tpu.dot_dimension_numbers<[1], [0], [0], [1], [0, 0, 1, 1], [], []>} : vector<8x256xbf16>, vector<256x512xbf16>, vector<8x512xf32> -> vector<8x512xf32>
    %c0_12 = arith.constant 0 : index
    %c0_13 = arith.constant 0 : index
    %32 = vector.load %arg5[%c0_12, %c0_13] : memref<1x512xf32, #tpu.memory_space<vmem>>, vector<1x512xf32>
    %33 = vector.broadcast %32 : vector<1x512xf32> to vector<8x512xf32>
    %34 = arith.addf %31, %33 : vector<8x512xf32>
    %cst_14 = arith.constant 5.000000e-01 : f32
    %35 = vector.broadcast %cst_14 : f32 to vector<8x512xf32>
    %36 = arith.mulf %35, %34 : vector<8x512xf32>
    %cst_15 = arith.constant 4.471500e-02 : f32
    %37 = vector.broadcast %cst_15 : f32 to vector<8x512xf32>
    %38 = arith.mulf %37, %34 : vector<8x512xf32>
    %39 = arith.mulf %38, %34 : vector<8x512xf32>
    %40 = arith.mulf %39, %34 : vector<8x512xf32>
    %41 = arith.addf %34, %40 : vector<8x512xf32>
    %cst_16 = arith.constant 0.797884583 : f32
    %42 = vector.broadcast %cst_16 : f32 to vector<8x512xf32>
    %43 = arith.mulf %42, %41 : vector<8x512xf32>
    %44 = math.tanh %43 : vector<8x512xf32>
    %cst_17 = arith.constant 1.000000e+00 : f32
    %45 = vector.broadcast %cst_17 : f32 to vector<8x512xf32>
    %46 = arith.addf %45, %44 : vector<8x512xf32>
    %47 = arith.mulf %36, %46 : vector<8x512xf32>
    %48 = arith.truncf %47 : vector<8x512xf32> to vector<8x512xbf16>
    %c0_18 = arith.constant 0 : index
    %c0_19 = arith.constant 0 : index
    %49 = vector.load %arg6[%c0_18, %c0_19] : memref<512x256xbf16, #tpu.memory_space<vmem>>, vector<512x256xbf16>
    %cst_20 = arith.constant dense<0.000000e+00> : vector<8x256xf32>
    %50 = tpu.matmul %48, %49, %cst_20 {dimension_numbers = #tpu.dot_dimension_numbers<[1], [0], [0], [1], [0, 0, 1, 1], [], []>} : vector<8x512xbf16>, vector<512x256xbf16>, vector<8x256xf32> -> vector<8x256xf32>
    %51 = vector.broadcast %7 : vector<1x256xf32> to vector<8x256xf32>
    %52 = arith.addf %50, %51 : vector<8x256xf32>
    %53 = arith.mulf %52, %52 : vector<8x256xf32>
    %54 = tpu.concatenate %52, %53 in 0 : vector<8x256xf32>, vector<8x256xf32> -> vector<16x256xf32>
    %55 = arith.truncf %54 : vector<16x256xf32> to vector<16x256xbf16>
    %cst_21 = arith.constant dense<0.000000e+00> : vector<16x256xf32>
    %56 = tpu.matmul %55, %1, %cst_21 {dimension_numbers = #tpu.dot_dimension_numbers<[1], [0], [0], [1], [0, 0, 1, 1], [], []>} : vector<16x256xbf16>, vector<256x256xbf16>, vector<16x256xf32> -> vector<16x256xf32>
    %57 = vector.extract_strided_slice %56 {offsets = [0, 0], sizes = [8, 256], strides = [1, 1]} : vector<16x256xf32> to vector<8x256xf32>
    %58 = vector.extract_strided_slice %56 {offsets = [8, 0], sizes = [8, 256], strides = [1, 1]} : vector<16x256xf32> to vector<8x256xf32>
    %59 = arith.mulf %57, %57 : vector<8x256xf32>
    %60 = arith.subf %58, %59 : vector<8x256xf32>
    %61 = arith.subf %52, %57 : vector<8x256xf32>
    %cst_22 = arith.constant 9.99999974E-6 : f32
    %62 = vector.broadcast %cst_22 : f32 to vector<8x256xf32>
    %63 = arith.addf %60, %62 : vector<8x256xf32>
    %64 = math.rsqrt %63 : vector<8x256xf32>
    %65 = arith.mulf %61, %64 : vector<8x256xf32>
    %66 = vector.broadcast %5 : vector<1x256xf32> to vector<8x256xf32>
    %67 = arith.mulf %65, %66 : vector<8x256xf32>
    %68 = vector.broadcast %6 : vector<1x256xf32> to vector<8x256xf32>
    %69 = arith.addf %67, %68 : vector<8x256xf32>
    %70 = arith.addf %69, %28 : vector<8x256xf32>
    %c0_23 = arith.constant 0 : index
    %c0_24 = arith.constant 0 : index
    %71 = vector.load %arg8[%c0_23, %c0_24] : memref<8x256xf32, #tpu.memory_space<vmem>>, vector<8x256xf32>
    tpu.vector_store %arg8[%c0_23, %c0_24], %70 {strides = array<i32>} : memref<8x256xf32, #tpu.memory_space<vmem>>, vector<8x256xf32>,
    return
  }
  func.func @transform_0(%arg0: i32) -> (i32, i32) {
    %c0_i32 = arith.constant 0 : i32
    %c0_i32_0 = arith.constant 0 : i32
    return %arg0, %c0_i32 : i32, i32
  }
  func.func @transform_1(%arg0: i32) -> (i32, i32) {
    %c0_i32 = arith.constant 0 : i32
    %c0_i32_0 = arith.constant 0 : i32
    %c0_i32_1 = arith.constant 0 : i32
    return %c0_i32, %c0_i32_0 : i32, i32
  }
  func.func @transform_2(%arg0: i32) -> (i32, i32) {
    %c0_i32 = arith.constant 0 : i32
    %c0_i32_0 = arith.constant 0 : i32
    %c0_i32_1 = arith.constant 0 : i32
    return %c0_i32, %c0_i32_0 : i32, i32
  }
  func.func @transform_3(%arg0: i32) -> (i32, i32) {
    %c0_i32 = arith.constant 0 : i32
    %c0_i32_0 = arith.constant 0 : i32
    %c0_i32_1 = arith.constant 0 : i32
    return %c0_i32, %c0_i32_0 : i32, i32
  }
  func.func @transform_4(%arg0: i32) -> (i32, i32) {
    %c0_i32 = arith.constant 0 : i32
    %c0_i32_0 = arith.constant 0 : i32
    %c0_i32_1 = arith.constant 0 : i32
    return %c0_i32, %c0_i32_0 : i32, i32
  }
  func.func @transform_5(%arg0: i32) -> (i32, i32) {
    %c0_i32 = arith.constant 0 : i32
    %c0_i32_0 = arith.constant 0 : i32
    %c0_i32_1 = arith.constant 0 : i32
    return %c0_i32, %c0_i32_0 : i32, i32
  }
  func.func @transform_6(%arg0: i32) -> (i32, i32) {
    %c0_i32 = arith.constant 0 : i32
    %c0_i32_0 = arith.constant 0 : i32
    %c0_i32_1 = arith.constant 0 : i32
    return %c0_i32, %c0_i32_0 : i32, i32
  }
  func.func @transform_7(%arg0: i32) -> (i32, i32) {
    %c0_i32 = arith.constant 0 : i32
    %c0_i32_0 = arith.constant 0 : i32
    return %arg0, %c0_i32 : i32, i32
  }
}

</mosaic_0001>

<llo_original>
// kernel: tpu_custom_call.1
$region0: #{tpu_custom_call.1}
  #allocation0 [shape = 'u32[]', space=smem, size = 0x4, offset = 0x4, fixed_abs, tag = 'smem constant byte address 0x4 - core index']
  #allocation1 [shape = 'u32[144,128]{1,0:T(1,128)}', space=vmem, size = 0x12000, scoped, tag = 'internal scratch']
  %s0 = inlined_call_operand.hbm [shape: f32[8,256], index: 0, kind: input, shape index: {}]
  %s1 = inlined_call_operand.hbm [shape: bf16[256,256], index: 1, kind: input, shape index: {}]
  %s2 = inlined_call_operand.hbm [shape: bf16[256,256], index: 2, kind: input, shape index: {}]
  %s3 = inlined_call_operand.hbm [shape: bf16[256,512], index: 3, kind: input, shape index: {}]
  %s4 = inlined_call_operand.vmem [shape: f32[1,512], index: 4, kind: input, shape index: {}]
  %s5 = inlined_call_operand.hbm [shape: bf16[512,256], index: 5, kind: input, shape index: {}]
  %s6 = inlined_call_operand.vmem [shape: f32[5,256], index: 6, kind: input, shape index: {}]
  %s7 = inlined_call_operand.hbm [shape: f32[8,256], index: 7, kind: output, shape index: {}]
  %s8 = sld [smem:[#allocation0]]
  $region58: #{tpu_custom_call.1} parent=0
    _
  %s10 = ssub.s32 1, %s8
  %s11 = scalar_select 0, %s10, %s8
  $region1: #{tpu_custom_call.1} parent=0
    #allocation2 [shape = 'u8[8192]{0}', space=vmem, size = 0x2000, scoped, tag = 'input window, operand 0, single buffered']
    #allocation3 [shape = 's32[1]{0}', space=sflag, size = 0x4, scoped, tag = 'scoped memory for tpu_custom_call.1']
    #allocation4 [shape = 's32[1]{0}', space=sflag, size = 0x4, scoped, tag = 'scoped memory for tpu_custom_call.1']
    #allocation5 [shape = 'u8[131072]{0}', space=vmem, size = 0x20000, scoped, tag = 'input window, operand 1, single buffered']
    #allocation6 [shape = 's32[1]{0}', space=sflag, size = 0x4, scoped, tag = 'scoped memory for tpu_custom_call.1']
    #allocation7 [shape = 'u8[131072]{0}', space=vmem, size = 0x20000, scoped, tag = 'input window, operand 2, single buffered']
    #allocation8 [shape = 'u8[262144]{0}', space=vmem, size = 0x40000, scoped, tag = 'input window, operand 3, single buffered']
    #allocation9 [shape = 's32[1]{0}', space=sflag, size = 0x4, scoped, tag = 'scoped memory for tpu_custom_call.1']
    #allocation10 [shape = 'u8[262144]{0}', space=vmem, size = 0x40000, scoped, tag = 'input window, operand 5, single buffered']
    #allocation11 [shape = 'u8[8192]{0}', space=vmem, size = 0x2000, scoped, tag = 'output window, operand 0, single buffered']
    %12 = vsyncpa [#allocation3], 0
    %13 = vsyncpa [#allocation6], 0
    %14 = vsyncpa [#allocation9], 0
    %15 = vsyncpa [#allocation4], 0
    // Predicated region
    $region2: #{tpu_custom_call.1} parent=1 // pred_check
      _
    $region3: #{tpu_custom_call.1} parent=1 // pred_check_branch
      %17 = sbr.rel (0) target = $region5
    $region4: #{tpu_custom_call.1} parent=1 // pred_region
      %s19 = ssub.s32 256, 256
      %20 = vsyncadd [#allocation3], %s19
      %s22 = sshll.u32 [#allocation2], 4
      %s23 = int_to_ptr.vmem [resolvable:$true] %s22
      %25 = dma.hbm_to_vmem [thread:$0]  %s0, 256, %s23, [#allocation3]
    $region5: #{tpu_custom_call.1} parent=1 // pred_fallthru
      _
    // Predicated region
    $region6: #{tpu_custom_call.1} parent=1 // pred_check
      _
    $region7: #{tpu_custom_call.1} parent=1 // pred_check_branch
      %27 = sbr.rel (0) target = $region9
    $region8: #{tpu_custom_call.1} parent=1 // pred_region
      %s29 = ssub.s32 4096, 4096
      %30 = vsyncadd [#allocation6], %s29
      %s31 = sshll.u32 [#allocation5], 4
      %s32 = int_to_ptr.vmem [resolvable:$true] %s31
      %37 = dma.hbm_to_vmem [thread:$0]  %s1, 4096, %s32, [#allocation6], 128, 128, 8
    $region9: #{tpu_custom_call.1} parent=1 // pred_fallthru
      _
    // Predicated region
    $region10: #{tpu_custom_call.1} parent=1 // pred_check
      _
    $region11: #{tpu_custom_call.1} parent=1 // pred_check_branch
      %39 = sbr.rel (0) target = $region13
    $region12: #{tpu_custom_call.1} parent=1 // pred_region
      %s41 = ssub.s32 4096, 4096
      %42 = vsyncadd [#allocation6], %s41
      %s43 = sshll.u32 [#allocation7], 4
      %s44 = int_to_ptr.vmem [resolvable:$true] %s43
      %49 = dma.hbm_to_vmem [thread:$0]  %s2, 4096, %s44, [#allocation6], 128, 128, 8
    $region13: #{tpu_custom_call.1} parent=1 // pred_fallthru
      _
    // Predicated region
    $region14: #{tpu_custom_call.1} parent=1 // pred_check
      _
    $region15: #{tpu_custom_call.1} parent=1 // pred_check_branch
      %51 = sbr.rel (0) target = $region17
    $region16: #{tpu_custom_call.1} parent=1 // pred_region
      %s53 = ssub.s32 8192, 8192
      %54 = vsyncadd [#allocation9], %s53
      %s55 = sshll.u32 [#allocation8], 4
      %s56 = int_to_ptr.vmem [resolvable:$true] %s55
      %61 = dma.hbm_to_vmem [thread:$0]  %s3, 8192, %s56, [#allocation9], 256, 256, 16
    $region17: #{tpu_custom_call.1} parent=1 // pred_fallthru
      _
    // Predicated region
    $region18: #{tpu_custom_call.1} parent=1 // pred_check
      _
    $region19: #{tpu_custom_call.1} parent=1 // pred_check_branch
      %63 = sbr.rel (0) target = $region21
    $region20: #{tpu_custom_call.1} parent=1 // pred_region
      _
    $region21: #{tpu_custom_call.1} parent=1 // pred_fallthru
      _
    // Predicated region
    $region22: #{tpu_custom_call.1} parent=1 // pred_check
      _
    $region23: #{tpu_custom_call.1} parent=1 // pred_check_branch
      %65 = sbr.rel (0) target = $region25
    $region24: #{tpu_custom_call.1} parent=1 // pred_region
      %s67 = ssub.s32 8192, 8192
      %68 = vsyncadd [#allocation9], %s67
      %s69 = sshll.u32 [#allocation10], 4
      %s70 = int_to_ptr.vmem [resolvable:$true] %s69
      %75 = dma.hbm_to_vmem [thread:$0]  %s5, 8192, %s70, [#allocation9], 128, 128, 8
    $region25: #{tpu_custom_call.1} parent=1 // pred_fallthru
      _
    // Predicated region
    $region26: #{tpu_custom_call.1} parent=1 // pred_check
      _
    $region27: #{tpu_custom_call.1} parent=1 // pred_check_branch
      %77 = sbr.rel (0) target = $region29
    $region28: #{tpu_custom_call.1} parent=1 // pred_region
      _
    $region29: #{tpu_custom_call.1} parent=1 // pred_fallthru
      _
    // Predicated region
    $region30: #{tpu_custom_call.1} parent=1 // pred_check
      _
    $region31: #{tpu_custom_call.1} parent=1 // pred_check_branch
      %79 = sbr.rel (0) target = $region33
    $region32: #{tpu_custom_call.1} parent=1 // pred_region
      %80 = dma.done [#allocation3], 256
    $region33: #{tpu_custom_call.1} parent=1 // pred_fallthru
      _
    // Predicated region
    $region34: #{tpu_custom_call.1} parent=1 // pred_check
      _
    $region35: #{tpu_custom_call.1} parent=1 // pred_check_branch
      %82 = sbr.rel (0) target = $region37
    $region36: #{tpu_custom_call.1} parent=1 // pred_region
      %83 = dma.done [#allocation6], 4096
    $region37: #{tpu_custom_call.1} parent=1 // pred_fallthru
      _
    // Predicated region
    $region38: #{tpu_custom_call.1} parent=1 // pred_check
      _
    $region39: #{tpu_custom_call.1} parent=1 // pred_check_branch
      %85 = sbr.rel (0) target = $region41
    $region40: #{tpu_custom_call.1} parent=1 // pred_region
      %86 = dma.done [#allocation6], 4096
    $region41: #{tpu_custom_call.1} parent=1 // pred_fallthru
      _
    // Predicated region
    $region42: #{tpu_custom_call.1} parent=1 // pred_check
      _
    $region43: #{tpu_custom_call.1} parent=1 // pred_check_branch
      %88 = sbr.rel (0) target = $region45
    $region44: #{tpu_custom_call.1} parent=1 // pred_region
      %89 = dma.done [#allocation9], 8192
    $region45: #{tpu_custom_call.1} parent=1 // pred_fallthru
      _
    // Predicated region
    $region46: #{tpu_custom_call.1} parent=1 // pred_check
      _
    $region47: #{tpu_custom_call.1} parent=1 // pred_check_branch
      %91 = sbr.rel (0) target = $region49
    $region48: #{tpu_custom_call.1} parent=1 // pred_region
      %92 = dma.done [#allocation9], 8192
    $region49: #{tpu_custom_call.1} parent=1 // pred_fallthru
      _
    %v93 = vld [vmem:[#allocation2] sm:$0xff]
    %v94 = vld [vmem:[#allocation2 + $0x8] sm:$0xff]
    %v95 = vld [vmem:[#allocation7] sm:$0xff]
    %v96 = vld [vmem:[#allocation7 + $0x8] sm:$0xff]
    %v97 = vld [vmem:[#allocation7 + $0x10] sm:$0xff]
    %v98 = vld [vmem:[#allocation7 + $0x18] sm:$0xff]
    %v99 = vld [vmem:[#allocation7 + $0x20] sm:$0xff]
    %v100 = vld [vmem:[#allocation7 + $0x28] sm:$0xff]
    %v101 = vld [vmem:[#allocation7 + $0x30] sm:$0xff]
    %v102 = vld [vmem:[#allocation7 + $0x38] sm:$0xff]
    %v103 = vld [vmem:[#allocation7 + $0x40] sm:$0xff]
    %v104 = vld [vmem:[#allocation7 + $0x48] sm:$0xff]
    %v105 = vld [vmem:[#allocation7 + $0x50] sm:$0xff]
    %v106 = vld [vmem:[#allocation7 + $0x58] sm:$0xff]
    %v107 = vld [vmem:[#allocation7 + $0x60] sm:$0xff]
    %v108 = vld [vmem:[#allocation7 + $0x68] sm:$0xff]
    %v109 = vld [vmem:[#allocation7 + $0x70] sm:$0xff]
    %v110 = vld [vmem:[#allocation7 + $0x78] sm:$0xff]
    %v111 = vld [vmem:[#allocation7 + $0x80] sm:$0xff]
    %v112 = vld [vmem:[#allocation7 + $0x88] sm:$0xff]
    %v113 = vld [vmem:[#allocation7 + $0x90] sm:$0xff]
    %v114 = vld [vmem:[#allocation7 + $0x98] sm:$0xff]
    %v115 = vld [vmem:[#allocation7 + $0xa0] sm:$0xff]
    %v116 = vld [vmem:[#allocation7 + $0xa8] sm:$0xff]
    %v117 = vld [vmem:[#allocation7 + $0xb0] sm:$0xff]
    %v118 = vld [vmem:[#allocation7 + $0xb8] sm:$0xff]
    %v119 = vld [vmem:[#allocation7 + $0xc0] sm:$0xff]
    %v120 = vld [vmem:[#allocation7 + $0xc8] sm:$0xff]
    %v121 = vld [vmem:[#allocation7 + $0xd0] sm:$0xff]
    %v122 = vld [vmem:[#allocation7 + $0xd8] sm:$0xff]
    %v123 = vld [vmem:[#allocation7 + $0xe0] sm:$0xff]
    %v124 = vld [vmem:[#allocation7 + $0xe8] sm:$0xff]
    %v125 = vld [vmem:[#allocation7 + $0xf0] sm:$0xff]
    %v126 = vld [vmem:[#allocation7 + $0xf8] sm:$0xff]
    %v127 = vld [vmem:[%s6] sm:$0x1f]
    %v128 = vld [vmem:[%s6 + $0x8] sm:$0x1f]
    %v129 = vpack.c.bf16 %v93, %v93
    %v130 = vpack.c.bf16 %v94, %v94
    %v131 = vld [vmem:[#allocation5] sm:$0xff]
    %v132 = vld [vmem:[#allocation5 + $0x8] sm:$0xff]
    %v133 = vld [vmem:[#allocation5 + $0x10] sm:$0xff]
    %v134 = vld [vmem:[#allocation5 + $0x18] sm:$0xff]
    %v135 = vld [vmem:[#allocation5 + $0x20] sm:$0xff]
    %v136 = vld [vmem:[#allocation5 + $0x28] sm:$0xff]
    %v137 = vld [vmem:[#allocation5 + $0x30] sm:$0xff]
    %v138 = vld [vmem:[#allocation5 + $0x38] sm:$0xff]
    %v139 = vld [vmem:[#allocation5 + $0x40] sm:$0xff]
    %v140 = vld [vmem:[#allocation5 + $0x48] sm:$0xff]
    %v141 = vld [vmem:[#allocation5 + $0x50] sm:$0xff]
    %v142 = vld [vmem:[#allocation5 + $0x58] sm:$0xff]
    %v143 = vld [vmem:[#allocation5 + $0x60] sm:$0xff]
    %v144 = vld [vmem:[#allocation5 + $0x68] sm:$0xff]
    %v145 = vld [vmem:[#allocation5 + $0x70] sm:$0xff]
    %v146 = vld [vmem:[#allocation5 + $0x78] sm:$0xff]
    %v147 = vld [vmem:[#allocation5 + $0x80] sm:$0xff]
    %v148 = vld [vmem:[#allocation5 + $0x88] sm:$0xff]
    %v149 = vld [vmem:[#allocation5 + $0x90] sm:$0xff]
    %v150 = vld [vmem:[#allocation5 + $0x98] sm:$0xff]
    %v151 = vld [vmem:[#allocation5 + $0xa0] sm:$0xff]
    %v152 = vld [vmem:[#allocation5 + $0xa8] sm:$0xff]
    %v153 = vld [vmem:[#allocation5 + $0xb0] sm:$0xff]
    %v154 = vld [vmem:[#allocation5 + $0xb8] sm:$0xff]
    %v155 = vld [vmem:[#allocation5 + $0xc0] sm:$0xff]
    %v156 = vld [vmem:[#allocation5 + $0xc8] sm:$0xff]
    %v157 = vld [vmem:[#allocation5 + $0xd0] sm:$0xff]
    %v158 = vld [vmem:[#allocation5 + $0xd8] sm:$0xff]
    %v159 = vld [vmem:[#allocation5 + $0xe0] sm:$0xff]
    %v160 = vld [vmem:[#allocation5 + $0xe8] sm:$0xff]
    %v161 = vld [vmem:[#allocation5 + $0xf0] sm:$0xff]
    %v162 = vld [vmem:[#allocation5 + $0xf8] sm:$0xff]
    %v195 = vunpack.c.l.b16 %v131
    %v196 = vunpack.c.h.b16 %v131
    %v197 = vunpack.c.l.b16 %v132
    %v198 = vunpack.c.h.b16 %v132
    %v199 = vunpack.c.l.b16 %v133
    %v200 = vunpack.c.h.b16 %v133
    %v201 = vunpack.c.l.b16 %v134
    %v202 = vunpack.c.h.b16 %v134
    %v203 = vunpack.c.l.b16 %v135
    %v204 = vunpack.c.h.b16 %v135
    %v205 = vunpack.c.l.b16 %v136
    %v206 = vunpack.c.h.b16 %v136
    %v207 = vunpack.c.l.b16 %v137
    %v208 = vunpack.c.h.b16 %v137
    %v209 = vunpack.c.l.b16 %v138
    %v210 = vunpack.c.h.b16 %v138
    %v211 = vunpack.c.l.b16 %v139
    %v212 = vunpack.c.h.b16 %v139
    %v213 = vunpack.c.l.b16 %v140
    %v214 = vunpack.c.h.b16 %v140
    %v215 = vunpack.c.l.b16 %v141
    %v216 = vunpack.c.h.b16 %v141
    %v217 = vunpack.c.l.b16 %v142
    %v218 = vunpack.c.h.b16 %v142
    %v219 = vunpack.c.l.b16 %v143
    %v220 = vunpack.c.h.b16 %v143
    %v221 = vunpack.c.l.b16 %v144
    %v222 = vunpack.c.h.b16 %v144
    %v223 = vunpack.c.l.b16 %v145
    %v224 = vunpack.c.h.b16 %v145
    %v225 = vunpack.c.l.b16 %v146
    %v226 = vunpack.c.h.b16 %v146
    %v227 = vunpack.c.l.b16 %v147
    %v228 = vunpack.c.h.b16 %v147
    %v229 = vunpack.c.l.b16 %v148
    %v230 = vunpack.c.h.b16 %v148
    %v231 = vunpack.c.l.b16 %v149
    %v232 = vunpack.c.h.b16 %v149
    %v233 = vunpack.c.l.b16 %v150
    %v234 = vunpack.c.h.b16 %v150
    %v235 = vunpack.c.l.b16 %v151
    %v236 = vunpack.c.h.b16 %v151
    %v237 = vunpack.c.l.b16 %v152
    %v238 = vunpack.c.h.b16 %v152
    %v239 = vunpack.c.l.b16 %v153
    %v240 = vunpack.c.h.b16 %v153
    %v241 = vunpack.c.l.b16 %v154
    %v242 = vunpack.c.h.b16 %v154
    %v243 = vunpack.c.l.b16 %v155
    %v244 = vunpack.c.h.b16 %v155
    %v245 = vunpack.c.l.b16 %v156
    %v246 = vunpack.c.h.b16 %v156
    %v247 = vunpack.c.l.b16 %v157
    %v248 = vunpack.c.h.b16 %v157
    %v249 = vunpack.c.l.b16 %v158
    %v250 = vunpack.c.h.b16 %v158
    %v251 = vunpack.c.l.b16 %v159
    %v252 = vunpack.c.h.b16 %v159
    %v253 = vunpack.c.l.b16 %v160
    %v254 = vunpack.c.h.b16 %v160
    %v255 = vunpack.c.l.b16 %v161
    %v256 = vunpack.c.h.b16 %v161
    %v257 = vunpack.c.l.b16 %v162
    %v258 = vunpack.c.h.b16 %v162
    %v259 = vpack.c.b16 %v197, %v195
    %v260 = vpack.c.b16 %v198, %v196
    %v261 = vpack.c.b16 %v201, %v199
    %v262 = vpack.c.b16 %v202, %v200
    %v263 = vpack.c.b16 %v205, %v203
    %v264 = vpack.c.b16 %v206, %v204
    %v265 = vpack.c.b16 %v209, %v207
    %v266 = vpack.c.b16 %v210, %v208
    %v267 = vpack.c.b16 %v213, %v211
    %v268 = vpack.c.b16 %v214, %v212
    %v269 = vpack.c.b16 %v217, %v215
    %v270 = vpack.c.b16 %v218, %v216
    %v271 = vpack.c.b16 %v221, %v219
    %v272 = vpack.c.b16 %v222, %v220
    %v273 = vpack.c.b16 %v225, %v223
    %v274 = vpack.c.b16 %v226, %v224
    %v275 = vpack.c.b16 %v229, %v227
    %v276 = vpack.c.b16 %v230, %v228
    %v277 = vpack.c.b16 %v233, %v231
    %v278 = vpack.c.b16 %v234, %v232
    %v279 = vpack.c.b16 %v237, %v235
    %v280 = vpack.c.b16 %v238, %v236
    %v281 = vpack.c.b16 %v241, %v239
    %v282 = vpack.c.b16 %v242, %v240
    %v283 = vpack.c.b16 %v245, %v243
    %v284 = vpack.c.b16 %v246, %v244
    %v285 = vpack.c.b16 %v249, %v247
    %v286 = vpack.c.b16 %v250, %v248
    %v287 = vpack.c.b16 %v253, %v251
    %v288 = vpack.c.b16 %v254, %v252
    %v289 = vpack.c.b16 %v257, %v255
    %v290 = vpack.c.b16 %v258, %v256
    %323 = vmatprep.subr.bf16.mxu0 %v260
    %324 = vmatpush1.bf16.msra.mxu0 %v259
    %325 = vmatprep.subr.bf16.mxu0 %v262
    %326 = vmatpush1.bf16.msra.mxu0 %v261
    %327 = vmatprep.subr.bf16.mxu0 %v264
    %328 = vmatpush1.bf16.msra.mxu0 %v263
    %329 = vmatprep.subr.bf16.mxu0 %v266
    %330 = vmatpush1.bf16.msra.mxu0 %v265
    %331 = vmatprep.subr.bf16.mxu0 %v268
    %332 = vmatpush1.bf16.msra.mxu0 %v267
    %333 = vmatprep.subr.bf16.mxu0 %v270
    %334 = vmatpush1.bf16.msra.mxu0 %v269
    %335 = vmatprep.subr.bf16.mxu0 %v272
    %336 = vmatpush1.bf16.msra.mxu0 %v271
    %337 = vmatprep.subr.bf16.mxu0 %v274
    %338 = vmatpush1.bf16.msra.mxu0 %v273
    %339 = vmatprep.subr.bf16.mxu0 %v276
    %340 = vmatpush1.bf16.msra.mxu0 %v275
    %341 = vmatprep.subr.bf16.mxu0 %v278
    %342 = vmatpush1.bf16.msra.mxu0 %v277
    %343 = vmatprep.subr.bf16.mxu0 %v280
    %344 = vmatpush1.bf16.msra.mxu0 %v279
    %345 = vmatprep.subr.bf16.mxu0 %v282
    %346 = vmatpush1.bf16.msra.mxu0 %v281
    %347 = vmatprep.subr.bf16.mxu0 %v284
    %348 = vmatpush1.bf16.msra.mxu0 %v283
    %349 = vmatprep.subr.bf16.mxu0 %v286
    %350 = vmatpush1.bf16.msra.mxu0 %v285
    %351 = vmatprep.subr.bf16.mxu0 %v288
    %352 = vmatpush1.bf16.msra.mxu0 %v287
    %353 = vmatprep.subr.bf16.mxu0 %v290
    %354 = vmatpush1.bf16.msra.mxu0 %v289
    %355 = vmatprep.mubr.bf16.mxu0 %v130
    %356 = vmatmul.mubr.bf16.gmra.mrb[0].mxu0 %v129
    %v357 = vpop.f32.mrb[0].mxu0
    %v358 = vadd.f32 0.0, %v357
    %v359 = vpop.f32.mrb[0].mxu0
    %v360 = vadd.f32 0.0, %v359
    %v361 = vpop.f32.mrb[0].mxu0
    %v362 = vpop.f32.mrb[0].mxu0
    %363 = vdwg.mxu0
    %v364 = vmul.f32 %v358, %v358
    %v365 = vmul.f32 %v360, %v360
    %v366 = vpack.c.bf16 %v364, %v358
    %v367 = vpack.c.bf16 %v365, %v360
    %v400 = vunpack.c.l.b16 %v95
    %v401 = vunpack.c.h.b16 %v95
    %v402 = vunpack.c.l.b16 %v96
    %v403 = vunpack.c.h.b16 %v96
    %v404 = vunpack.c.l.b16 %v97
    %v405 = vunpack.c.h.b16 %v97
    %v406 = vunpack.c.l.b16 %v98
    %v407 = vunpack.c.h.b16 %v98
    %v408 = vunpack.c.l.b16 %v99
    %v409 = vunpack.c.h.b16 %v99
    %v410 = vunpack.c.l.b16 %v100
    %v411 = vunpack.c.h.b16 %v100
    %v412 = vunpack.c.l.b16 %v101
    %v413 = vunpack.c.h.b16 %v101
    %v414 = vunpack.c.l.b16 %v102
    %v415 = vunpack.c.h.b16 %v102
    %v416 = vunpack.c.l.b16 %v103
    %v417 = vunpack.c.h.b16 %v103
    %v418 = vunpack.c.l.b16 %v104
    %v419 = vunpack.c.h.b16 %v104
    %v420 = vunpack.c.l.b16 %v105
    %v421 = vunpack.c.h.b16 %v105
    %v422 = vunpack.c.l.b16 %v106
    %v423 = vunpack.c.h.b16 %v106
    %v424 = vunpack.c.l.b16 %v107
    %v425 = vunpack.c.h.b16 %v107
    %v426 = vunpack.c.l.b16 %v108
    %v427 = vunpack.c.h.b16 %v108
    %v428 = vunpack.c.l.b16 %v109
    %v429 = vunpack.c.h.b16 %v109
    %v430 = vunpack.c.l.b16 %v110
    %v431 = vunpack.c.h.b16 %v110
    %v432 = vunpack.c.l.b16 %v111
    %v433 = vunpack.c.h.b16 %v111
    %v434 = vunpack.c.l.b16 %v112
    %v435 = vunpack.c.h.b16 %v112
    %v436 = vunpack.c.l.b16 %v113
    %v437 = vunpack.c.h.b16 %v113
    %v438 = vunpack.c.l.b16 %v114
    %v439 = vunpack.c.h.b16 %v114
    %v440 = vunpack.c.l.b16 %v115
    %v441 = vunpack.c.h.b16 %v115
    %v442 = vunpack.c.l.b16 %v116
    %v443 = vunpack.c.h.b16 %v116
    %v444 = vunpack.c.l.b16 %v117
    %v445 = vunpack.c.h.b16 %v117
    %v446 = vunpack.c.l.b16 %v118
    %v447 = vunpack.c.h.b16 %v118
    %v448 = vunpack.c.l.b16 %v119
    %v449 = vunpack.c.h.b16 %v119
    %v450 = vunpack.c.l.b16 %v120
    %v451 = vunpack.c.h.b16 %v120
    %v452 = vunpack.c.l.b16 %v121
    %v453 = vunpack.c.h.b16 %v121
    %v454 = vunpack.c.l.b16 %v122
    %v455 = vunpack.c.h.b16 %v122
    %v456 = vunpack.c.l.b16 %v123
    %v457 = vunpack.c.h.b16 %v123
    %v458 = vunpack.c.l.b16 %v124
    %v459 = vunpack.c.h.b16 %v124
    %v460 = vunpack.c.l.b16 %v125
    %v461 = vunpack.c.h.b16 %v125
    %v462 = vunpack.c.l.b16 %v126
    %v463 = vunpack.c.h.b16 %v126
    %v464 = vpack.c.b16 %v402, %v400
    %v465 = vpack.c.b16 %v403, %v401
    %v466 = vpack.c.b16 %v406, %v404
    %v467 = vpack.c.b16 %v407, %v405
    %v468 = vpack.c.b16 %v410, %v408
    %v469 = vpack.c.b16 %v411, %v409
    %v470 = vpack.c.b16 %v414, %v412
    %v471 = vpack.c.b16 %v415, %v413
    %v472 = vpack.c.b16 %v418, %v416
    %v473 = vpack.c.b16 %v419, %v417
    %v474 = vpack.c.b16 %v422, %v420
    %v475 = vpack.c.b16 %v423, %v421
    %v476 = vpack.c.b16 %v426, %v424
    %v477 = vpack.c.b16 %v427, %v425
    %v478 = vpack.c.b16 %v430, %v428
    %v479 = vpack.c.b16 %v431, %v429
    %v480 = vpack.c.b16 %v434, %v432
    %v481 = vpack.c.b16 %v435, %v433
    %v482 = vpack.c.b16 %v438, %v436
    %v483 = vpack.c.b16 %v439, %v437
    %v484 = vpack.c.b16 %v442, %v440
    %v485 = vpack.c.b16 %v443, %v441
    %v486 = vpack.c.b16 %v446, %v444
    %v487 = vpack.c.b16 %v447, %v445
    %v488 = vpack.c.b16 %v450, %v448
    %v489 = vpack.c.b16 %v451, %v449
    %v490 = vpack.c.b16 %v454, %v452
    %v491 = vpack.c.b16 %v455, %v453
    %v492 = vpack.c.b16 %v458, %v456
    %v493 = vpack.c.b16 %v459, %v457
    %v494 = vpack.c.b16 %v462, %v460
    %v495 = vpack.c.b16 %v463, %v461
    %528 = vmatprep.subr.bf16.mxu0 %v465
    %529 = vmatpush1.bf16.msra.mxu0 %v464
    %530 = vmatprep.subr.bf16.mxu0 %v467
    %531 = vmatpush1.bf16.msra.mxu0 %v466
    %532 = vmatprep.subr.bf16.mxu0 %v469
    %533 = vmatpush1.bf16.msra.mxu0 %v468
    %534 = vmatprep.subr.bf16.mxu0 %v471
    %535 = vmatpush1.bf16.msra.mxu0 %v470
    %536 = vmatprep.subr.bf16.mxu0 %v473
    %537 = vmatpush1.bf16.msra.mxu0 %v472
    %538 = vmatprep.subr.bf16.mxu0 %v475
    %539 = vmatpush1.bf16.msra.mxu0 %v474
    %540 = vmatprep.subr.bf16.mxu0 %v477
    %541 = vmatpush1.bf16.msra.mxu0 %v476
    %542 = vmatprep.subr.bf16.mxu0 %v479
    %543 = vmatpush1.bf16.msra.mxu0 %v478
    %544 = vmatprep.subr.bf16.mxu0 %v481
    %545 = vmatpush1.bf16.msra.mxu0 %v480
    %546 = vmatprep.subr.bf16.mxu0 %v483
    %547 = vmatpush1.bf16.msra.mxu0 %v482
    %548 = vmatprep.subr.bf16.mxu0 %v485
    %549 = vmatpush1.bf16.msra.mxu0 %v484
    %550 = vmatprep.subr.bf16.mxu0 %v487
    %551 = vmatpush1.bf16.msra.mxu0 %v486
    %552 = vmatprep.subr.bf16.mxu0 %v489
    %553 = vmatpush1.bf16.msra.mxu0 %v488
    %554 = vmatprep.subr.bf16.mxu0 %v491
    %555 = vmatpush1.bf16.msra.mxu0 %v490
    %556 = vmatprep.subr.bf16.mxu0 %v493
    %557 = vmatpush1.bf16.msra.mxu0 %v492
    %558 = vmatprep.subr.bf16.mxu0 %v495
    %559 = vmatpush1.bf16.msra.mxu0 %v494
    %560 = vmatprep.mubr.bf16.mxu0 %v367
    %561 = vmatmul.mubr.bf16.gmra.mrb[0].mxu0 %v366
    %v562 = vpop.f32.mrb[0].mxu0
    %v563 = vadd.f32 0.0, %v562
    %v564 = vpop.f32.mrb[0].mxu0
    %v565 = vadd.f32 0.0, %v564
    %v566 = vpop.f32.mrb[0].mxu0
    %v567 = vadd.f32 0.0, %v566
    %v568 = vpop.f32.mrb[0].mxu0
    %v569 = vadd.f32 0.0, %v568
    %570 = vdwg.mxu0
    %v571 = vmul.f32 %v563, %v563
    %v572 = vmul.f32 %v565, %v565
    %v573 = vsub.f32 %v567, %v571
    %v574 = vsub.f32 %v569, %v572
    %v575 = vsub.f32 %v358, %v563
    %v576 = vsub.f32 %v360, %v565
    %v577 = vadd.f32 %v573, 1e-05
    %v578 = vadd.f32 %v574, 1e-05
    %v579 = vrsqrt.pop %v577
    %v580 = vrsqrt.pop %v578
    %v581 = vmul.f32 %v575, %v579
    %v582 = vmul.f32 %v576, %v580
    %v583 = vlaneseq
    %v584 = vshrl.u32 %v583, 7
    %v585 = vsub.s32 0, %v584
    %v586 = vrot.slane %v127, %v585
    %v587 = vlaneseq
    %v588 = vshrl.u32 %v587, 7
    %v589 = vsub.s32 0, %v588
    %v590 = vrot.slane %v128, %v589
    %v591 = vmul.f32 %v581, %v586
    %v592 = vmul.f32 %v582, %v590
    %v593 = vlaneseq
    %v594 = vshrl.u32 %v593, 7
    %v595 = vsub.s32 1, %v594
    %v596 = vrot.slane %v127, %v595
    %v597 = vlaneseq
    %v598 = vshrl.u32 %v597, 7
    %v599 = vsub.s32 1, %v598
    %v600 = vrot.slane %v128, %v599
    %v601 = vadd.f32 %v591, %v596
    %v602 = vadd.f32 %v592, %v600
    %v603 = vadd.f32 %v601, %v93
    %v604 = vadd.f32 %v602, %v94
    %v605 = vpack.c.bf16 %v603, %v603
    %v606 = vpack.c.bf16 %v604, %v604
    %v607 = vld [vmem:[#allocation8] sm:$0xff]
    %v608 = vld [vmem:[#allocation8 + $0x8] sm:$0xff]
    %v609 = vld [vmem:[#allocation8 + $0x10] sm:$0xff]
    %v610 = vld [vmem:[#allocation8 + $0x18] sm:$0xff]
    %v611 = vld [vmem:[#allocation8 + $0x20] sm:$0xff]
    %v612 = vld [vmem:[#allocation8 + $0x28] sm:$0xff]
    %v613 = vld [vmem:[#allocation8 + $0x30] sm:$0xff]
    %v614 = vld [vmem:[#allocation8 + $0x38] sm:$0xff]
    %v615 = vld [vmem:[#allocation8 + $0x40] sm:$0xff]
    %v616 = vld [vmem:[#allocation8 + $0x48] sm:$0xff]
    %v617 = vld [vmem:[#allocation8 + $0x50] sm:$0xff]
    %v618 = vld [vmem:[#allocation8 + $0x58] sm:$0xff]
    %v619 = vld [vmem:[#allocation8 + $0x60] sm:$0xff]
    %v620 = vld [vmem:[#allocation8 + $0x68] sm:$0xff]
    %v621 = vld [vmem:[#allocation8 + $0x70] sm:$0xff]
    %v622 = vld [vmem:[#allocation8 + $0x78] sm:$0xff]
    %v623 = vld [vmem:[#allocation8 + $0x80] sm:$0xff]
    %v624 = vld [vmem:[#allocation8 + $0x88] sm:$0xff]
    %v625 = vld [vmem:[#allocation8 + $0x90] sm:$0xff]
    %v626 = vld [vmem:[#allocation8 + $0x98] sm:$0xff]
    %v627 = vld [vmem:[#allocation8 + $0xa0] sm:$0xff]
    %v628 = vld [vmem:[#allocation8 + $0xa8] sm:$0xff]
    %v629 = vld [vmem:[#allocation8 + $0xb0] sm:$0xff]
    %v630 = vld [vmem:[#allocation8 + $0xb8] sm:$0xff]
    %v631 = vld [vmem:[#allocation8 + $0xc0] sm:$0xff]
    %v632 = vld [vmem:[#allocation8 + $0xc8] sm:$0xff]
    %v633 = vld [vmem:[#allocation8 + $0xd0] sm:$0xff]
    %v634 = vld [vmem:[#allocation8 + $0xd8] sm:$0xff]
    %v635 = vld [vmem:[#allocation8 + $0xe0] sm:$0xff]
    %v636 = vld [vmem:[#allocation8 + $0xe8] sm:$0xff]
    %v637 = vld [vmem:[#allocation8 + $0xf0] sm:$0xff]
    %v638 = vld [vmem:[#allocation8 + $0xf8] sm:$0xff]
    %v639 = vld [vmem:[#allocation8 + $0x100] sm:$0xff]
    %v640 = vld [vmem:[#allocation8 + $0x108] sm:$0xff]
    %v641 = vld [vmem:[#allocation8 + $0x110] sm:$0xff]
    %v642 = vld [vmem:[#allocation8 + $0x118] sm:$0xff]
    %v643 = vld [vmem:[#allocation8 + $0x120] sm:$0xff]
    %v644 = vld [vmem:[#allocation8 + $0x128] sm:$0xff]
    %v645 = vld [vmem:[#allocation8 + $0x130] sm:$0xff]
    %v646 = vld [vmem:[#allocation8 + $0x138] sm:$0xff]
    %v647 = vld [vmem:[#allocation8 + $0x140] sm:$0xff]
    %v648 = vld [vmem:[#allocation8 + $0x148] sm:$0xff]
    %v649 = vld [vmem:[#allocation8 + $0x150] sm:$0xff]
    %v650 = vld [vmem:[#allocation8 + $0x158] sm:$0xff]
    %v651 = vld [vmem:[#allocation8 + $0x160] sm:$0xff]
    %v652 = vld [vmem:[#allocation8 + $0x168] sm:$0xff]
    %v653 = vld [vmem:[#allocation8 + $0x170] sm:$0xff]
    %v654 = vld [vmem:[#allocation8 + $0x178] sm:$0xff]
    %v655 = vld [vmem:[#allocation8 + $0x180] sm:$0xff]
    %v656 = vld [vmem:[#allocation8 + $0x188] sm:$0xff]
    %v657 = vld [vmem:[#allocation8 + $0x190] sm:$0xff]
    %v658 = vld [vmem:[#allocation8 + $0x198] sm:$0xff]
    %v659 = vld [vmem:[#allocation8 + $0x1a0] sm:$0xff]
    %v660 = vld [vmem:[#allocation8 + $0x1a8] sm:$0xff]
    %v661 = vld [vmem:[#allocation8 + $0x1b0] sm:$0xff]
    %v662 = vld [vmem:[#allocation8 + $0x1b8] sm:$0xff]
    %v663 = vld [vmem:[#allocation8 + $0x1c0] sm:$0xff]
    %v664 = vld [vmem:[#allocation8 + $0x1c8] sm:$0xff]
    %v665 = vld [vmem:[#allocation8 + $0x1d0] sm:$0xff]
    %v666 = vld [vmem:[#allocation8 + $0x1d8] sm:$0xff]
    %v667 = vld [vmem:[#allocation8 + $0x1e0] sm:$0xff]
    %v668 = vld [vmem:[#allocation8 + $0x1e8] sm:$0xff]
    %v669 = vld [vmem:[#allocation8 + $0x1f0] sm:$0xff]
    %v670 = vld [vmem:[#allocation8 + $0x1f8] sm:$0xff]
    %v671 = vld [vmem:[%s4] sm:$0xf]
    %v673 = vlaneseq
    %v674 = vshrl.u32 %v673, 7
    %v675 = vsub.s32 0, %v674
    %v676 = vrot.slane %v671, %v675
    %v677 = vlaneseq
    %v678 = vshrl.u32 %v677, 7
    %v679 = vsub.s32 1, %v678
    %v680 = vrot.slane %v671, %v679
    %v681 = vlaneseq
    %v682 = vshrl.u32 %v681, 7
    %v683 = vsub.s32 2, %v682
    %v684 = vrot.slane %v671, %v683
    %v685 = vlaneseq
    %v686 = vshrl.u32 %v685, 7
    %v687 = vsub.s32 3, %v686
    %v688 = vrot.slane %v671, %v687
    %v757 = vunpack.c.l.b16 %v607
    %v758 = vunpack.c.h.b16 %v607
    %v759 = vunpack.c.l.b16 %v608
    %v760 = vunpack.c.h.b16 %v608
    %v761 = vunpack.c.l.b16 %v609
    %v762 = vunpack.c.h.b16 %v609
    %v763 = vunpack.c.l.b16 %v610
    %v764 = vunpack.c.h.b16 %v610
    %v765 = vunpack.c.l.b16 %v611
    %v766 = vunpack.c.h.b16 %v611
    %v767 = vunpack.c.l.b16 %v612
    %v768 = vunpack.c.h.b16 %v612
    %v769 = vunpack.c.l.b16 %v613
    %v770 = vunpack.c.h.b16 %v613
    %v771 = vunpack.c.l.b16 %v614
    %v772 = vunpack.c.h.b16 %v614
    %v773 = vunpack.c.l.b16 %v615
    %v774 = vunpack.c.h.b16 %v615
    %v775 = vunpack.c.l.b16 %v616
    %v776 = vunpack.c.h.b16 %v616
    %v777 = vunpack.c.l.b16 %v617
    %v778 = vunpack.c.h.b16 %v617
    %v779 = vunpack.c.l.b16 %v618
    %v780 = vunpack.c.h.b16 %v618
    %v781 = vunpack.c.l.b16 %v619
    %v782 = vunpack.c.h.b16 %v619
    %v783 = vunpack.c.l.b16 %v620
    %v784 = vunpack.c.h.b16 %v620
    %v785 = vunpack.c.l.b16 %v621
    %v786 = vunpack.c.h.b16 %v621
    %v787 = vunpack.c.l.b16 %v622
    %v788 = vunpack.c.h.b16 %v622
    %v789 = vunpack.c.l.b16 %v623
    %v790 = vunpack.c.h.b16 %v623
    %v791 = vunpack.c.l.b16 %v624
    %v792 = vunpack.c.h.b16 %v624
    %v793 = vunpack.c.l.b16 %v625
    %v794 = vunpack.c.h.b16 %v625
    %v795 = vunpack.c.l.b16 %v626
    %v796 = vunpack.c.h.b16 %v626
    %v797 = vunpack.c.l.b16 %v627
    %v798 = vunpack.c.h.b16 %v627
    %v799 = vunpack.c.l.b16 %v628
    %v800 = vunpack.c.h.b16 %v628
    %v801 = vunpack.c.l.b16 %v629
    %v802 = vunpack.c.h.b16 %v629
    %v803 = vunpack.c.l.b16 %v630
    %v804 = vunpack.c.h.b16 %v630
    %v805 = vunpack.c.l.b16 %v631
    %v806 = vunpack.c.h.b16 %v631
    %v807 = vunpack.c.l.b16 %v632
    %v808 = vunpack.c.h.b16 %v632
    %v809 = vunpack.c.l.b16 %v633
    %v810 = vunpack.c.h.b16 %v633
    %v811 = vunpack.c.l.b16 %v634
    %v812 = vunpack.c.h.b16 %v634
    %v813 = vunpack.c.l.b16 %v635
    %v814 = vunpack.c.h.b16 %v635
    %v815 = vunpack.c.l.b16 %v636
    %v816 = vunpack.c.h.b16 %v636
    %v817 = vunpack.c.l.b16 %v637
    %v818 = vunpack.c.h.b16 %v637
    %v819 = vunpack.c.l.b16 %v638
    %v820 = vunpack.c.h.b16 %v638
    %v821 = vunpack.c.l.b16 %v639
    %v822 = vunpack.c.h.b16 %v639
    %v823 = vunpack.c.l.b16 %v640
    %v824 = vunpack.c.h.b16 %v640
    %v825 = vunpack.c.l.b16 %v641
    %v826 = vunpack.c.h.b16 %v641
    %v827 = vunpack.c.l.b16 %v642
    %v828 = vunpack.c.h.b16 %v642
    %v829 = vunpack.c.l.b16 %v643
    %v830 = vunpack.c.h.b16 %v643
    %v831 = vunpack.c.l.b16 %v644
    %v832 = vunpack.c.h.b16 %v644
    %v833 = vunpack.c.l.b16 %v645
    %v834 = vunpack.c.h.b16 %v645
    %v835 = vunpack.c.l.b16 %v646
    %v836 = vunpack.c.h.b16 %v646
    %v837 = vunpack.c.l.b16 %v647
    %v838 = vunpack.c.h.b16 %v647
    %v839 = vunpack.c.l.b16 %v648
    %v840 = vunpack.c.h.b16 %v648
    %v841 = vunpack.c.l.b16 %v649
    %v842 = vunpack.c.h.b16 %v649
    %v843 = vunpack.c.l.b16 %v650
    %v844 = vunpack.c.h.b16 %v650
    %v845 = vunpack.c.l.b16 %v651
    %v846 = vunpack.c.h.b16 %v651
    %v847 = vunpack.c.l.b16 %v652
    %v848 = vunpack.c.h.b16 %v652
    %v849 = vunpack.c.l.b16 %v653
    %v850 = vunpack.c.h.b16 %v653
    %v851 = vunpack.c.l.b16 %v654
    %v852 = vunpack.c.h.b16 %v654
    %v853 = vunpack.c.l.b16 %v655
    %v854 = vunpack.c.h.b16 %v655
    %v855 = vunpack.c.l.b16 %v656
    %v856 = vunpack.c.h.b16 %v656
    %v857 = vunpack.c.l.b16 %v657
    %v858 = vunpack.c.h.b16 %v657
    %v859 = vunpack.c.l.b16 %v658
    %v860 = vunpack.c.h.b16 %v658
    %v861 = vunpack.c.l.b16 %v659
    %v862 = vunpack.c.h.b16 %v659
    %v863 = vunpack.c.l.b16 %v660
    %v864 = vunpack.c.h.b16 %v660
    %v865 = vunpack.c.l.b16 %v661
    %v866 = vunpack.c.h.b16 %v661
    %v867 = vunpack.c.l.b16 %v662
    %v868 = vunpack.c.h.b16 %v662
    %v869 = vunpack.c.l.b16 %v663
    %v870 = vunpack.c.h.b16 %v663
    %v871 = vunpack.c.l.b16 %v664
    %v872 = vunpack.c.h.b16 %v664
    %v873 = vunpack.c.l.b16 %v665
    %v874 = vunpack.c.h.b16 %v665
    %v875 = vunpack.c.l.b16 %v666
    %v876 = vunpack.c.h.b16 %v666
    %v877 = vunpack.c.l.b16 %v667
    %v878 = vunpack.c.h.b16 %v667
    %v879 = vunpack.c.l.b16 %v668
    %v880 = vunpack.c.h.b16 %v668
    %v881 = vunpack.c.l.b16 %v669
    %v882 = vunpack.c.h.b16 %v669
    %v883 = vunpack.c.l.b16 %v670
    %v884 = vunpack.c.h.b16 %v670
    %v885 = vpack.c.b16 %v761, %v757
    %v886 = vpack.c.b16 %v762, %v758
    %v887 = vpack.c.b16 %v763, %v759
    %v888 = vpack.c.b16 %v764, %v760
    %v889 = vpack.c.b16 %v769, %v765
    %v890 = vpack.c.b16 %v770, %v766
    %v891 = vpack.c.b16 %v771, %v767
    %v892 = vpack.c.b16 %v772, %v768
    %v893 = vpack.c.b16 %v777, %v773
    %v894 = vpack.c.b16 %v778, %v774
    %v895 = vpack.c.b16 %v779, %v775
    %v896 = vpack.c.b16 %v780, %v776
    %v897 = vpack.c.b16 %v785, %v781
    %v898 = vpack.c.b16 %v786, %v782
    %v899 = vpack.c.b16 %v787, %v783
    %v900 = vpack.c.b16 %v788, %v784
    %v901 = vpack.c.b16 %v793, %v789
    %v902 = vpack.c.b16 %v794, %v790
    %v903 = vpack.c.b16 %v795, %v791
    %v904 = vpack.c.b16 %v796, %v792
    %v905 = vpack.c.b16 %v801, %v797
    %v906 = vpack.c.b16 %v802, %v798
    %v907 = vpack.c.b16 %v803, %v799
    %v908 = vpack.c.b16 %v804, %v800
    %v909 = vpack.c.b16 %v809, %v805
    %v910 = vpack.c.b16 %v810, %v806
    %v911 = vpack.c.b16 %v811, %v807
    %v912 = vpack.c.b16 %v812, %v808
    %v913 = vpack.c.b16 %v817, %v813
    %v914 = vpack.c.b16 %v818, %v814
    %v915 = vpack.c.b16 %v819, %v815
    %v916 = vpack.c.b16 %v820, %v816
    %v917 = vpack.c.b16 %v825, %v821
    %v918 = vpack.c.b16 %v826, %v822
    %v919 = vpack.c.b16 %v827, %v823
    %v920 = vpack.c.b16 %v828, %v824
    %v921 = vpack.c.b16 %v833, %v829
    %v922 = vpack.c.b16 %v834, %v830
    %v923 = vpack.c.b16 %v835, %v831
    %v924 = vpack.c.b16 %v836, %v832
    %v925 = vpack.c.b16 %v841, %v837
    %v926 = vpack.c.b16 %v842, %v838
    %v927 = vpack.c.b16 %v843, %v839
    %v928 = vpack.c.b16 %v844, %v840
    %v929 = vpack.c.b16 %v849, %v845
    %v930 = vpack.c.b16 %v850, %v846
    %v931 = vpack.c.b16 %v851, %v847
    %v932 = vpack.c.b16 %v852, %v848
    %v933 = vpack.c.b16 %v857, %v853
    %v934 = vpack.c.b16 %v858, %v854
    %v935 = vpack.c.b16 %v859, %v855
    %v936 = vpack.c.b16 %v860, %v856
    %v937 = vpack.c.b16 %v865, %v861
    %v938 = vpack.c.b16 %v866, %v862
    %v939 = vpack.c.b16 %v867, %v863
    %v940 = vpack.c.b16 %v868, %v864
    %v941 = vpack.c.b16 %v873, %v869
    %v942 = vpack.c.b16 %v874, %v870
    %v943 = vpack.c.b16 %v875, %v871
    %v944 = vpack.c.b16 %v876, %v872
    %v945 = vpack.c.b16 %v881, %v877
    %v946 = vpack.c.b16 %v882, %v878
    %v947 = vpack.c.b16 %v883, %v879
    %v948 = vpack.c.b16 %v884, %v880
    %1013 = vmatprep.subr.bf16.mxu0 %v886
    %1014 = vmatpush1.bf16.msra.mxu0 %v885
    %1015 = vmatprep.subr.bf16.mxu0 %v890
    %1016 = vmatpush1.bf16.msra.mxu0 %v889
    %1017 = vmatprep.subr.bf16.mxu0 %v894
    %1018 = vmatpush1.bf16.msra.mxu0 %v893
    %1019 = vmatprep.subr.bf16.mxu0 %v898
    %1020 = vmatpush1.bf16.msra.mxu0 %v897
    %1021 = vmatprep.subr.bf16.mxu0 %v902
    %1022 = vmatpush1.bf16.msra.mxu0 %v901
    %1023 = vmatprep.subr.bf16.mxu0 %v906
    %1024 = vmatpush1.bf16.msra.mxu0 %v905
    %1025 = vmatprep.subr.bf16.mxu0 %v910
    %1026 = vmatpush1.bf16.msra.mxu0 %v909
    %1027 = vmatprep.subr.bf16.mxu0 %v914
    %1028 = vmatpush1.bf16.msra.mxu0 %v913
    %1029 = vmatprep.subr.bf16.mxu0 %v918
    %1030 = vmatpush1.bf16.msra.mxu0 %v917
    %1031 = vmatprep.subr.bf16.mxu0 %v922
    %1032 = vmatpush1.bf16.msra.mxu0 %v921
    %1033 = vmatprep.subr.bf16.mxu0 %v926
    %1034 = vmatpush1.bf16.msra.mxu0 %v925
    %1035 = vmatprep.subr.bf16.mxu0 %v930
    %1036 = vmatpush1.bf16.msra.mxu0 %v929
    %1037 = vmatprep.subr.bf16.mxu0 %v934
    %1038 = vmatpush1.bf16.msra.mxu0 %v933
    %1039 = vmatprep.subr.bf16.mxu0 %v938
    %1040 = vmatpush1.bf16.msra.mxu0 %v937
    %1041 = vmatprep.subr.bf16.mxu0 %v942
    %1042 = vmatpush1.bf16.msra.mxu0 %v941
    %1043 = vmatprep.subr.bf16.mxu0 %v946
    %1044 = vmatpush1.bf16.msra.mxu0 %v945
    %1045 = vmatprep.mubr.bf16.mxu0 %v606
    %1046 = vmatmul.mubr.bf16.gmra.mrb[0].mxu0 %v605
    %v1047 = vpop.f32.mrb[0].mxu0
    %v1048 = vadd.f32 %v676, %v1047
    %v1049 = vpop.f32.mrb[0].mxu0
    %v1050 = vadd.f32 %v680, %v1049
    %v1051 = vpop.f32.mrb[0].mxu0
    %v1052 = vpop.f32.mrb[0].mxu0
    %1053 = vdwg.mxu0
    %1054 = vmatprep.subr.bf16.mxu0 %v888
    %1055 = vmatpush1.bf16.msra.mxu0 %v887
    %1056 = vmatprep.subr.bf16.mxu0 %v892
    %1057 = vmatpush1.bf16.msra.mxu0 %v891
    %1058 = vmatprep.subr.bf16.mxu0 %v896
    %1059 = vmatpush1.bf16.msra.mxu0 %v895
    %1060 = vmatprep.subr.bf16.mxu0 %v900
    %1061 = vmatpush1.bf16.msra.mxu0 %v899
    %1062 = vmatprep.subr.bf16.mxu0 %v904
    %1063 = vmatpush1.bf16.msra.mxu0 %v903
    %1064 = vmatprep.subr.bf16.mxu0 %v908
    %1065 = vmatpush1.bf16.msra.mxu0 %v907
    %1066 = vmatprep.subr.bf16.mxu0 %v912
    %1067 = vmatpush1.bf16.msra.mxu0 %v911
    %1068 = vmatprep.subr.bf16.mxu0 %v916
    %1069 = vmatpush1.bf16.msra.mxu0 %v915
    %1070 = vmatprep.subr.bf16.mxu0 %v920
    %1071 = vmatpush1.bf16.msra.mxu0 %v919
    %1072 = vmatprep.subr.bf16.mxu0 %v924
    %1073 = vmatpush1.bf16.msra.mxu0 %v923
    %1074 = vmatprep.subr.bf16.mxu0 %v928
    %1075 = vmatpush1.bf16.msra.mxu0 %v927
    %1076 = vmatprep.subr.bf16.mxu0 %v932
    %1077 = vmatpush1.bf16.msra.mxu0 %v931
    %1078 = vmatprep.subr.bf16.mxu0 %v936
    %1079 = vmatpush1.bf16.msra.mxu0 %v935
    %1080 = vmatprep.subr.bf16.mxu0 %v940
    %1081 = vmatpush1.bf16.msra.mxu0 %v939
    %1082 = vmatprep.subr.bf16.mxu0 %v944
    %1083 = vmatpush1.bf16.msra.mxu0 %v943
    %1084 = vmatprep.subr.bf16.mxu0 %v948
    %1085 = vmatpush1.bf16.msra.mxu0 %v947
    %1086 = vmatprep.mubr.bf16.mxu0 %v606
    %1087 = vmatmul.mubr.bf16.gmra.mrb[0].mxu0 %v605
    %v1088 = vpop.f32.mrb[0].mxu0
    %v1089 = vadd.f32 %v684, %v1088
    %v1090 = vpop.f32.mrb[0].mxu0
    %v1091 = vadd.f32 %v688, %v1090
    %v1092 = vpop.f32.mrb[0].mxu0
    %v1093 = vpop.f32.mrb[0].mxu0
    %1094 = vdwg.mxu0
    %v1095 = vmul.f32 %v1048, 0.5
    %v1096 = vmul.f32 %v1050, 0.5
    %v1097 = vmul.f32 %v1089, 0.5
    %v1098 = vmul.f32 %v1091, 0.5
    %v1099 = vmul.f32 %v1048, 0.044715
    %v1100 = vmul.f32 %v1050, 0.044715
    %v1101 = vmul.f32 %v1089, 0.044715
    %v1102 = vmul.f32 %v1091, 0.044715
    %v1103 = vmul.f32 %v1099, %v1048
    %v1104 = vmul.f32 %v1100, %v1050
    %v1105 = vmul.f32 %v1101, %v1089
    %v1106 = vmul.f32 %v1102, %v1091
    %v1107 = vmul.f32 %v1103, %v1048
    %v1108 = vmul.f32 %v1104, %v1050
    %v1109 = vmul.f32 %v1105, %v1089
    %v1110 = vmul.f32 %v1106, %v1091
    %v1111 = vadd.f32 %v1048, %v1107
    %v1112 = vadd.f32 %v1050, %v1108
    %v1113 = vadd.f32 %v1089, %v1109
    %v1114 = vadd.f32 %v1091, %v1110
    %v1115 = vmul.f32 %v1111, 0.7978846
    %v1116 = vmul.f32 %v1112, 0.7978846
    %v1117 = vmul.f32 %v1113, 0.7978846
    %v1118 = vmul.f32 %v1114, 0.7978846
    %v1119 = vtanh.pop %v1115
    %v1120 = vtanh.pop %v1116
    %v1121 = vtanh.pop %v1117
    %v1122 = vtanh.pop %v1118
    %v1123 = vadd.f32 %v1119, 1.0
    %v1124 = vadd.f32 %v1120, 1.0
    %v1125 = vadd.f32 %v1121, 1.0
    %v1126 = vadd.f32 %v1122, 1.0
    %v1127 = vmul.f32 %v1095, %v1123
    %v1128 = vmul.f32 %v1096, %v1124
    %v1129 = vmul.f32 %v1097, %v1125
    %v1130 = vmul.f32 %v1098, %v1126
    %v1131 = vpack.c.bf16 %v1127, %v1127
    %v1132 = vpack.c.bf16 %v1128, %v1128
    %v1133 = vpack.c.bf16 %v1129, %v1129
    %v1134 = vpack.c.bf16 %v1130, %v1130
    %v1135 = vld [vmem:[#allocation10] sm:$0xff]
    %v1136 = vld [vmem:[#allocation10 + $0x8] sm:$0xff]
    %v1137 = vld [vmem:[#allocation10 + $0x10] sm:$0xff]
    %v1138 = vld [vmem:[#allocation10 + $0x18] sm:$0xff]
    %v1139 = vld [vmem:[#allocation10 + $0x20] sm:$0xff]
    %v1140 = vld [vmem:[#allocation10 + $0x28] sm:$0xff]
    %v1141 = vld [vmem:[#allocation10 + $0x30] sm:$0xff]
    %v1142 = vld [vmem:[#allocation10 + $0x38] sm:$0xff]
    %v1143 = vld [vmem:[#allocation10 + $0x40] sm:$0xff]
    %v1144 = vld [vmem:[#allocation10 + $0x48] sm:$0xff]
    %v1145 = vld [vmem:[#allocation10 + $0x50] sm:$0xff]
    %v1146 = vld [vmem:[#allocation10 + $0x58] sm:$0xff]
    %v1147 = vld [vmem:[#allocation10 + $0x60] sm:$0xff]
    %v1148 = vld [vmem:[#allocation10 + $0x68] sm:$0xff]
    %v1149 = vld [vmem:[#allocation10 + $0x70] sm:$0xff]
    %v1150 = vld [vmem:[#allocation10 + $0x78] sm:$0xff]
    %v1151 = vld [vmem:[#allocation10 + $0x80] sm:$0xff]
    %v1152 = vld [vmem:[#allocation10 + $0x88] sm:$0xff]
    %v1153 = vld [vmem:[#allocation10 + $0x90] sm:$0xff]
    %v1154 = vld [vmem:[#allocation10 + $0x98] sm:$0xff]
    %v1155 = vld [vmem:[#allocation10 + $0xa0] sm:$0xff]
    %v1156 = vld [vmem:[#allocation10 + $0xa8] sm:$0xff]
    %v1157 = vld [vmem:[#allocation10 + $0xb0] sm:$0xff]
    %v1158 = vld [vmem:[#allocation10 + $0xb8] sm:$0xff]
    %v1159 = vld [vmem:[#allocation10 + $0xc0] sm:$0xff]
    %v1160 = vld [vmem:[#allocation10 + $0xc8] sm:$0xff]
    %v1161 = vld [vmem:[#allocation10 + $0xd0] sm:$0xff]
    %v1162 = vld [vmem:[#allocation10 + $0xd8] sm:$0xff]
    %v1163 = vld [vmem:[#allocation10 + $0xe0] sm:$0xff]
    %v1164 = vld [vmem:[#allocation10 + $0xe8] sm:$0xff]
    %v1165 = vld [vmem:[#allocation10 + $0xf0] sm:$0xff]
    %v1166 = vld [vmem:[#allocation10 + $0xf8] sm:$0xff]
    %v1167 = vld [vmem:[#allocation10 + $0x100] sm:$0xff]
    %v1168 = vld [vmem:[#allocation10 + $0x108] sm:$0xff]
    %v1169 = vld [vmem:[#allocation10 + $0x110] sm:$0xff]
    %v1170 = vld [vmem:[#allocation10 + $0x118] sm:$0xff]
    %v1171 = vld [vmem:[#allocation10 + $0x120] sm:$0xff]
    %v1172 = vld [vmem:[#allocation10 + $0x128] sm:$0xff]
    %v1173 = vld [vmem:[#allocation10 + $0x130] sm:$0xff]
    %v1174 = vld [vmem:[#allocation10 + $0x138] sm:$0xff]
    %v1175 = vld [vmem:[#allocation10 + $0x140] sm:$0xff]
    %v1176 = vld [vmem:[#allocation10 + $0x148] sm:$0xff]
    %v1177 = vld [vmem:[#allocation10 + $0x150] sm:$0xff]
    %v1178 = vld [vmem:[#allocation10 + $0x158] sm:$0xff]
    %v1179 = vld [vmem:[#allocation10 + $0x160] sm:$0xff]
    %v1180 = vld [vmem:[#allocation10 + $0x168] sm:$0xff]
    %v1181 = vld [vmem:[#allocation10 + $0x170] sm:$0xff]
    %v1182 = vld [vmem:[#allocation10 + $0x178] sm:$0xff]
    %v1183 = vld [vmem:[#allocation10 + $0x180] sm:$0xff]
    %v1184 = vld [vmem:[#allocation10 + $0x188] sm:$0xff]
    %v1185 = vld [vmem:[#allocation10 + $0x190] sm:$0xff]
    %v1186 = vld [vmem:[#allocation10 + $0x198] sm:$0xff]
    %v1187 = vld [vmem:[#allocation10 + $0x1a0] sm:$0xff]
    %v1188 = vld [vmem:[#allocation10 + $0x1a8] sm:$0xff]
    %v1189 = vld [vmem:[#allocation10 + $0x1b0] sm:$0xff]
    %v1190 = vld [vmem:[#allocation10 + $0x1b8] sm:$0xff]
    %v1191 = vld [vmem:[#allocation10 + $0x1c0] sm:$0xff]
    %v1192 = vld [vmem:[#allocation10 + $0x1c8] sm:$0xff]
    %v1193 = vld [vmem:[#allocation10 + $0x1d0] sm:$0xff]
    %v1194 = vld [vmem:[#allocation10 + $0x1d8] sm:$0xff]
    %v1195 = vld [vmem:[#allocation10 + $0x1e0] sm:$0xff]
    %v1196 = vld [vmem:[#allocation10 + $0x1e8] sm:$0xff]
    %v1197 = vld [vmem:[#allocation10 + $0x1f0] sm:$0xff]
    %v1198 = vld [vmem:[#allocation10 + $0x1f8] sm:$0xff]
    %v1199 = vlaneseq
    %v1200 = vshrl.u32 %v1199, 7
    %v1201 = vsub.s32 4, %v1200
    %v1202 = vrot.slane %v127, %v1201
    %v1203 = vlaneseq
    %v1204 = vshrl.u32 %v1203, 7
    %v1205 = vsub.s32 4, %v1204
    %v1206 = vrot.slane %v128, %v1205
    %v1271 = vunpack.c.l.b16 %v1135
    %v1272 = vunpack.c.h.b16 %v1135
    %v1273 = vunpack.c.l.b16 %v1136
    %v1274 = vunpack.c.h.b16 %v1136
    %v1275 = vunpack.c.l.b16 %v1137
    %v1276 = vunpack.c.h.b16 %v1137
    %v1277 = vunpack.c.l.b16 %v1138
    %v1278 = vunpack.c.h.b16 %v1138
    %v1279 = vunpack.c.l.b16 %v1139
    %v1280 = vunpack.c.h.b16 %v1139
    %v1281 = vunpack.c.l.b16 %v1140
    %v1282 = vunpack.c.h.b16 %v1140
    %v1283 = vunpack.c.l.b16 %v1141
    %v1284 = vunpack.c.h.b16 %v1141
    %v1285 = vunpack.c.l.b16 %v1142
    %v1286 = vunpack.c.h.b16 %v1142
    %v1287 = vunpack.c.l.b16 %v1143
    %v1288 = vunpack.c.h.b16 %v1143
    %v1289 = vunpack.c.l.b16 %v1144
    %v1290 = vunpack.c.h.b16 %v1144
    %v1291 = vunpack.c.l.b16 %v1145
    %v1292 = vunpack.c.h.b16 %v1145
    %v1293 = vunpack.c.l.b16 %v1146
    %v1294 = vunpack.c.h.b16 %v1146
    %v1295 = vunpack.c.l.b16 %v1147
    %v1296 = vunpack.c.h.b16 %v1147
    %v1297 = vunpack.c.l.b16 %v1148
    %v1298 = vunpack.c.h.b16 %v1148
    %v1299 = vunpack.c.l.b16 %v1149
    %v1300 = vunpack.c.h.b16 %v1149
    %v1301 = vunpack.c.l.b16 %v1150
    %v1302 = vunpack.c.h.b16 %v1150
    %v1303 = vunpack.c.l.b16 %v1151
    %v1304 = vunpack.c.h.b16 %v1151
    %v1305 = vunpack.c.l.b16 %v1152
    %v1306 = vunpack.c.h.b16 %v1152
    %v1307 = vunpack.c.l.b16 %v1153
    %v1308 = vunpack.c.h.b16 %v1153
    %v1309 = vunpack.c.l.b16 %v1154
    %v1310 = vunpack.c.h.b16 %v1154
    %v1311 = vunpack.c.l.b16 %v1155
    %v1312 = vunpack.c.h.b16 %v1155
    %v1313 = vunpack.c.l.b16 %v1156
    %v1314 = vunpack.c.h.b16 %v1156
    %v1315 = vunpack.c.l.b16 %v1157
    %v1316 = vunpack.c.h.b16 %v1157
    %v1317 = vunpack.c.l.b16 %v1158
    %v1318 = vunpack.c.h.b16 %v1158
    %v1319 = vunpack.c.l.b16 %v1159
    %v1320 = vunpack.c.h.b16 %v1159
    %v1321 = vunpack.c.l.b16 %v1160
    %v1322 = vunpack.c.h.b16 %v1160
    %v1323 = vunpack.c.l.b16 %v1161
    %v1324 = vunpack.c.h.b16 %v1161
    %v1325 = vunpack.c.l.b16 %v1162
    %v1326 = vunpack.c.h.b16 %v1162
    %v1327 = vunpack.c.l.b16 %v1163
    %v1328 = vunpack.c.h.b16 %v1163
    %v1329 = vunpack.c.l.b16 %v1164
    %v1330 = vunpack.c.h.b16 %v1164
    %v1331 = vunpack.c.l.b16 %v1165
    %v1332 = vunpack.c.h.b16 %v1165
    %v1333 = vunpack.c.l.b16 %v1166
    %v1334 = vunpack.c.h.b16 %v1166
    %v1335 = vunpack.c.l.b16 %v1167
    %v1336 = vunpack.c.h.b16 %v1167
    %v1337 = vunpack.c.l.b16 %v1168
    %v1338 = vunpack.c.h.b16 %v1168
    %v1339 = vunpack.c.l.b16 %v1169
    %v1340 = vunpack.c.h.b16 %v1169
    %v1341 = vunpack.c.l.b16 %v1170
    %v1342 = vunpack.c.h.b16 %v1170
    %v1343 = vunpack.c.l.b16 %v1171
    %v1344 = vunpack.c.h.b16 %v1171
    %v1345 = vunpack.c.l.b16 %v1172
    %v1346 = vunpack.c.h.b16 %v1172
    %v1347 = vunpack.c.l.b16 %v1173
    %v1348 = vunpack.c.h.b16 %v1173
    %v1349 = vunpack.c.l.b16 %v1174
    %v1350 = vunpack.c.h.b16 %v1174
    %v1351 = vunpack.c.l.b16 %v1175
    %v1352 = vunpack.c.h.b16 %v1175
    %v1353 = vunpack.c.l.b16 %v1176
    %v1354 = vunpack.c.h.b16 %v1176
    %v1355 = vunpack.c.l.b16 %v1177
    %v1356 = vunpack.c.h.b16 %v1177
    %v1357 = vunpack.c.l.b16 %v1178
    %v1358 = vunpack.c.h.b16 %v1178
    %v1359 = vunpack.c.l.b16 %v1179
    %v1360 = vunpack.c.h.b16 %v1179
    %v1361 = vunpack.c.l.b16 %v1180
    %v1362 = vunpack.c.h.b16 %v1180
    %v1363 = vunpack.c.l.b16 %v1181
    %v1364 = vunpack.c.h.b16 %v1181
    %v1365 = vunpack.c.l.b16 %v1182
    %v1366 = vunpack.c.h.b16 %v1182
    %v1367 = vunpack.c.l.b16 %v1183
    %v1368 = vunpack.c.h.b16 %v1183
    %v1369 = vunpack.c.l.b16 %v1184
    %v1370 = vunpack.c.h.b16 %v1184
    %v1371 = vunpack.c.l.b16 %v1185
    %v1372 = vunpack.c.h.b16 %v1185
    %v1373 = vunpack.c.l.b16 %v1186
    %v1374 = vunpack.c.h.b16 %v1186
    %v1375 = vunpack.c.l.b16 %v1187
    %v1376 = vunpack.c.h.b16 %v1187
    %v1377 = vunpack.c.l.b16 %v1188
    %v1378 = vunpack.c.h.b16 %v1188
    %v1379 = vunpack.c.l.b16 %v1189
    %v1380 = vunpack.c.h.b16 %v1189
    %v1381 = vunpack.c.l.b16 %v1190
    %v1382 = vunpack.c.h.b16 %v1190
    %v1383 = vunpack.c.l.b16 %v1191
    %v1384 = vunpack.c.h.b16 %v1191
    %v1385 = vunpack.c.l.b16 %v1192
    %v1386 = vunpack.c.h.b16 %v1192
    %v1387 = vunpack.c.l.b16 %v1193
    %v1388 = vunpack.c.h.b16 %v1193
    %v1389 = vunpack.c.l.b16 %v1194
    %v1390 = vunpack.c.h.b16 %v1194
    %v1391 = vunpack.c.l.b16 %v1195
    %v1392 = vunpack.c.h.b16 %v1195
    %v1393 = vunpack.c.l.b16 %v1196
    %v1394 = vunpack.c.h.b16 %v1196
    %v1395 = vunpack.c.l.b16 %v1197
    %v1396 = vunpack.c.h.b16 %v1197
    %v1397 = vunpack.c.l.b16 %v1198
    %v1398 = vunpack.c.h.b16 %v1198
    %v1399 = vpack.c.b16 %v1273, %v1271
    %v1400 = vpack.c.b16 %v1274, %v1272
    %v1401 = vpack.c.b16 %v1277, %v1275
    %v1402 = vpack.c.b16 %v1278, %v1276
    %v1403 = vpack.c.b16 %v1281, %v1279
    %v1404 = vpack.c.b16 %v1282, %v1280
    %v1405 = vpack.c.b16 %v1285, %v1283
    %v1406 = vpack.c.b16 %v1286, %v1284
    %v1407 = vpack.c.b16 %v1289, %v1287
    %v1408 = vpack.c.b16 %v1290, %v1288
    %v1409 = vpack.c.b16 %v1293, %v1291
    %v1410 = vpack.c.b16 %v1294, %v1292
    %v1411 = vpack.c.b16 %v1297, %v1295
    %v1412 = vpack.c.b16 %v1298, %v1296
    %v1413 = vpack.c.b16 %v1301, %v1299
    %v1414 = vpack.c.b16 %v1302, %v1300
    %v1415 = vpack.c.b16 %v1305, %v1303
    %v1416 = vpack.c.b16 %v1306, %v1304
    %v1417 = vpack.c.b16 %v1309, %v1307
    %v1418 = vpack.c.b16 %v1310, %v1308
    %v1419 = vpack.c.b16 %v1313, %v1311
    %v1420 = vpack.c.b16 %v1314, %v1312
    %v1421 = vpack.c.b16 %v1317, %v1315
    %v1422 = vpack.c.b16 %v1318, %v1316
    %v1423 = vpack.c.b16 %v1321, %v1319
    %v1424 = vpack.c.b16 %v1322, %v1320
    %v1425 = vpack.c.b16 %v1325, %v1323
    %v1426 = vpack.c.b16 %v1326, %v1324
    %v1427 = vpack.c.b16 %v1329, %v1327
    %v1428 = vpack.c.b16 %v1330, %v1328
    %v1429 = vpack.c.b16 %v1333, %v1331
    %v1430 = vpack.c.b16 %v1334, %v1332
    %v1431 = vpack.c.b16 %v1337, %v1335
    %v1432 = vpack.c.b16 %v1338, %v1336
    %v1433 = vpack.c.b16 %v1341, %v1339
    %v1434 = vpack.c.b16 %v1342, %v1340
    %v1435 = vpack.c.b16 %v1345, %v1343
    %v1436 = vpack.c.b16 %v1346, %v1344
    %v1437 = vpack.c.b16 %v1349, %v1347
    %v1438 = vpack.c.b16 %v1350, %v1348
    %v1439 = vpack.c.b16 %v1353, %v1351
    %v1440 = vpack.c.b16 %v1354, %v1352
    %v1441 = vpack.c.b16 %v1357, %v1355
    %v1442 = vpack.c.b16 %v1358, %v1356
    %v1443 = vpack.c.b16 %v1361, %v1359
    %v1444 = vpack.c.b16 %v1362, %v1360
    %v1445 = vpack.c.b16 %v1365, %v1363
    %v1446 = vpack.c.b16 %v1366, %v1364
    %v1447 = vpack.c.b16 %v1369, %v1367
    %v1448 = vpack.c.b16 %v1370, %v1368
    %v1449 = vpack.c.b16 %v1373, %v1371
    %v1450 = vpack.c.b16 %v1374, %v1372
    %v1451 = vpack.c.b16 %v1377, %v1375
    %v1452 = vpack.c.b16 %v1378, %v1376
    %v1453 = vpack.c.b16 %v1381, %v1379
    %v1454 = vpack.c.b16 %v1382, %v1380
    %v1455 = vpack.c.b16 %v1385, %v1383
    %v1456 = vpack.c.b16 %v1386, %v1384
    %v1457 = vpack.c.b16 %v1389, %v1387
    %v1458 = vpack.c.b16 %v1390, %v1388
    %v1459 = vpack.c.b16 %v1393, %v1391
    %v1460 = vpack.c.b16 %v1394, %v1392
    %v1461 = vpack.c.b16 %v1397, %v1395
    %v1462 = vpack.c.b16 %v1398, %v1396
    %1527 = vmatprep.subr.bf16.mxu0 %v1400
    %1528 = vmatpush1.bf16.msra.mxu0 %v1399
    %1529 = vmatprep.subr.bf16.mxu0 %v1402
    %1530 = vmatpush1.bf16.msra.mxu0 %v1401
    %1531 = vmatprep.subr.bf16.mxu0 %v1404
    %1532 = vmatpush1.bf16.msra.mxu0 %v1403
    %1533 = vmatprep.subr.bf16.mxu0 %v1406
    %1534 = vmatpush1.bf16.msra.mxu0 %v1405
    %1535 = vmatprep.subr.bf16.mxu0 %v1408
    %1536 = vmatpush1.bf16.msra.mxu0 %v1407
    %1537 = vmatprep.subr.bf16.mxu0 %v1410
    %1538 = vmatpush1.bf16.msra.mxu0 %v1409
    %1539 = vmatprep.subr.bf16.mxu0 %v1412
    %1540 = vmatpush1.bf16.msra.mxu0 %v1411
    %1541 = vmatprep.subr.bf16.mxu0 %v1414
    %1542 = vmatpush1.bf16.msra.mxu0 %v1413
    %1543 = vmatprep.subr.bf16.mxu0 %v1416
    %1544 = vmatpush1.bf16.msra.mxu0 %v1415
    %1545 = vmatprep.subr.bf16.mxu0 %v1418
    %1546 = vmatpush1.bf16.msra.mxu0 %v1417
    %1547 = vmatprep.subr.bf16.mxu0 %v1420
    %1548 = vmatpush1.bf16.msra.mxu0 %v1419
    %1549 = vmatprep.subr.bf16.mxu0 %v1422
    %1550 = vmatpush1.bf16.msra.mxu0 %v1421
    %1551 = vmatprep.subr.bf16.mxu0 %v1424
    %1552 = vmatpush1.bf16.msra.mxu0 %v1423
    %1553 = vmatprep.subr.bf16.mxu0 %v1426
    %1554 = vmatpush1.bf16.msra.mxu0 %v1425
    %1555 = vmatprep.subr.bf16.mxu0 %v1428
    %1556 = vmatpush1.bf16.msra.mxu0 %v1427
    %1557 = vmatprep.subr.bf16.mxu0 %v1430
    %1558 = vmatpush1.bf16.msra.mxu0 %v1429
    %1559 = vmatprep.mubr.bf16.mxu0 %v1132
    %1560 = vmatmul.mubr.bf16.gmra.mrb[0].mxu0 %v1131
    %v1561 = vpop.f32.mrb[0].mxu0
    %v1562 = vadd.f32 %v1202, %v1561
    %v1563 = vpop.f32.mrb[0].mxu0
    %v1564 = vadd.f32 %v1206, %v1563
    %v1565 = vpop.f32.mrb[0].mxu0
    %v1566 = vpop.f32.mrb[0].mxu0
    %1567 = vdwg.mxu0
    %1568 = vmatprep.subr.bf16.mxu0 %v1432
    %1569 = vmatpush1.bf16.msra.mxu0 %v1431
    %1570 = vmatprep.subr.bf16.mxu0 %v1434
    %1571 = vmatpush1.bf16.msra.mxu0 %v1433
    %1572 = vmatprep.subr.bf16.mxu0 %v1436
    %1573 = vmatpush1.bf16.msra.mxu0 %v1435
    %1574 = vmatprep.subr.bf16.mxu0 %v1438
    %1575 = vmatpush1.bf16.msra.mxu0 %v1437
    %1576 = vmatprep.subr.bf16.mxu0 %v1440
    %1577 = vmatpush1.bf16.msra.mxu0 %v1439
    %1578 = vmatprep.subr.bf16.mxu0 %v1442
    %1579 = vmatpush1.bf16.msra.mxu0 %v1441
    %1580 = vmatprep.subr.bf16.mxu0 %v1444
    %1581 = vmatpush1.bf16.msra.mxu0 %v1443
    %1582 = vmatprep.subr.bf16.mxu0 %v1446
    %1583 = vmatpush1.bf16.msra.mxu0 %v1445
    %1584 = vmatprep.subr.bf16.mxu0 %v1448
    %1585 = vmatpush1.bf16.msra.mxu0 %v1447
    %1586 = vmatprep.subr.bf16.mxu0 %v1450
    %1587 = vmatpush1.bf16.msra.mxu0 %v1449
    %1588 = vmatprep.subr.bf16.mxu0 %v1452
    %1589 = vmatpush1.bf16.msra.mxu0 %v1451
    %1590 = vmatprep.subr.bf16.mxu0 %v1454
    %1591 = vmatpush1.bf16.msra.mxu0 %v1453
    %1592 = vmatprep.subr.bf16.mxu0 %v1456
    %1593 = vmatpush1.bf16.msra.mxu0 %v1455
    %1594 = vmatprep.subr.bf16.mxu0 %v1458
    %1595 = vmatpush1.bf16.msra.mxu0 %v1457
    %1596 = vmatprep.subr.bf16.mxu0 %v1460
    %1597 = vmatpush1.bf16.msra.mxu0 %v1459
    %1598 = vmatprep.subr.bf16.mxu0 %v1462
    %1599 = vmatpush1.bf16.msra.mxu0 %v1461
    %1600 = vmatprep.mubr.bf16.mxu0 %v1134
    %1601 = vmatmul.mubr.bf16.gmra.mrb[0].mxu0 %v1133
    %v1602 = vpop.f32.mrb[0].mxu0
    %v1603 = vadd.f32 %v1562, %v1602
    %v1604 = vpop.f32.mrb[0].mxu0
    %v1605 = vadd.f32 %v1564, %v1604
    %v1606 = vpop.f32.mrb[0].mxu0
    %v1607 = vpop.f32.mrb[0].mxu0
    %1608 = vdwg.mxu0
    %v1609 = vmul.f32 %v1603, %v1603
    %v1610 = vmul.f32 %v1605, %v1605
    %v1611 = vpack.c.bf16 %v1609, %v1603
    %v1612 = vpack.c.bf16 %v1610, %v1605
    %1613 = vmatprep.subr.bf16.mxu0 %v465
    %1614 = vmatpush1.bf16.msra.mxu0 %v464
    %1615 = vmatprep.subr.bf16.mxu0 %v467
    %1616 = vmatpush1.bf16.msra.mxu0 %v466
    %1617 = vmatprep.subr.bf16.mxu0 %v469
    %1618 = vmatpush1.bf16.msra.mxu0 %v468
    %1619 = vmatprep.subr.bf16.mxu0 %v471
    %1620 = vmatpush1.bf16.msra.mxu0 %v470
    %1621 = vmatprep.subr.bf16.mxu0 %v473
    %1622 = vmatpush1.bf16.msra.mxu0 %v472
    %1623 = vmatprep.subr.bf16.mxu0 %v475
    %1624 = vmatpush1.bf16.msra.mxu0 %v474
    %1625 = vmatprep.subr.bf16.mxu0 %v477
    %1626 = vmatpush1.bf16.msra.mxu0 %v476
    %1627 = vmatprep.subr.bf16.mxu0 %v479
    %1628 = vmatpush1.bf16.msra.mxu0 %v478
    %1629 = vmatprep.subr.bf16.mxu0 %v481
    %1630 = vmatpush1.bf16.msra.mxu0 %v480
    %1631 = vmatprep.subr.bf16.mxu0 %v483
    %1632 = vmatpush1.bf16.msra.mxu0 %v482
    %1633 = vmatprep.subr.bf16.mxu0 %v485
    %1634 = vmatpush1.bf16.msra.mxu0 %v484
    %1635 = vmatprep.subr.bf16.mxu0 %v487
    %1636 = vmatpush1.bf16.msra.mxu0 %v486
    %1637 = vmatprep.subr.bf16.mxu0 %v489
    %1638 = vmatpush1.bf16.msra.mxu0 %v488
    %1639 = vmatprep.subr.bf16.mxu0 %v491
    %1640 = vmatpush1.bf16.msra.mxu0 %v490
    %1641 = vmatprep.subr.bf16.mxu0 %v493
    %1642 = vmatpush1.bf16.msra.mxu0 %v492
    %1643 = vmatprep.subr.bf16.mxu0 %v495
    %1644 = vmatpush1.bf16.msra.mxu0 %v494
    %1645 = vmatprep.mubr.bf16.mxu0 %v1612
    %1646 = vmatmul.mubr.bf16.gmra.mrb[0].mxu0 %v1611
    %v1647 = vpop.f32.mrb[0].mxu0
    %v1648 = vadd.f32 0.0, %v1647
    %v1649 = vpop.f32.mrb[0].mxu0
    %v1650 = vadd.f32 0.0, %v1649
    %v1651 = vpop.f32.mrb[0].mxu0
    %v1652 = vadd.f32 0.0, %v1651
    %v1653 = vpop.f32.mrb[0].mxu0
    %v1654 = vadd.f32 0.0, %v1653
    %1655 = vdwg.mxu0
    %v1656 = vmul.f32 %v1648, %v1648
    %v1657 = vmul.f32 %v1650, %v1650
    %v1658 = vsub.f32 %v1652, %v1656
    %v1659 = vsub.f32 %v1654, %v1657
    %v1660 = vsub.f32 %v1603, %v1648
    %v1661 = vsub.f32 %v1605, %v1650
    %v1662 = vadd.f32 %v1658, 1e-05
    %v1663 = vadd.f32 %v1659, 1e-05
    %v1664 = vrsqrt.pop %v1662
    %v1665 = vrsqrt.pop %v1663
    %v1666 = vmul.f32 %v1660, %v1664
    %v1667 = vmul.f32 %v1661, %v1665
    %v1668 = vlaneseq
    %v1669 = vshrl.u32 %v1668, 7
    %v1670 = vsub.s32 2, %v1669
    %v1671 = vrot.slane %v127, %v1670
    %v1672 = vlaneseq
    %v1673 = vshrl.u32 %v1672, 7
    %v1674 = vsub.s32 2, %v1673
    %v1675 = vrot.slane %v128, %v1674
    %v1676 = vmul.f32 %v1666, %v1671
    %v1677 = vmul.f32 %v1667, %v1675
    %v1678 = vlaneseq
    %v1679 = vshrl.u32 %v1678, 7
    %v1680 = vsub.s32 3, %v1679
    %v1681 = vrot.slane %v127, %v1680
    %v1682 = vlaneseq
    %v1683 = vshrl.u32 %v1682, 7
    %v1684 = vsub.s32 3, %v1683
    %v1685 = vrot.slane %v128, %v1684
    %v1686 = vadd.f32 %v1676, %v1681
    %v1687 = vadd.f32 %v1677, %v1685
    %v1688 = vadd.f32 %v1686, %v603
    %v1689 = vadd.f32 %v1687, %v604
    %1690 = vst [vmem:[#allocation11] sm:$0xff] %v1688
    %1691 = vst [vmem:[#allocation11 + $0x8] sm:$0xff] %v1689
    // Predicated region
    $region50: #{tpu_custom_call.1} parent=1 // pred_check
      _
    $region51: #{tpu_custom_call.1} parent=1 // pred_check_branch
      %1693 = sbr.rel (0) target = $region53
    $region52: #{tpu_custom_call.1} parent=1 // pred_region
      %s1695 = ssub.s32 256, 256
      %1696 = vsyncadd [#allocation4], %s1695
      %s1698 = sshll.u32 [#allocation11], 4
      %s1699 = int_to_ptr.vmem [resolvable:$true] %s1698
      %1701 = dma.vmem_to_hbm [thread:$0]  %s1699, 256, %s7, [#allocation4]
    $region53: #{tpu_custom_call.1} parent=1 // pred_fallthru
      _
    // Predicated region
    $region54: #{tpu_custom_call.1} parent=1 // pred_check
      _
    $region55: #{tpu_custom_call.1} parent=1 // pred_check_branch
      %1703 = sbr.rel (0) target = $region57
    $region56: #{tpu_custom_call.1} parent=1 // pred_region
      %1704 = dma.done [#allocation4], 256
    $region57: #{tpu_custom_call.1} parent=1 // pred_fallthru
      _
    %1705 = vsyncpa [#allocation3], 1
    %1706 = vsyncpa [#allocation6], 1
    %1707 = vsyncpa [#allocation9], 1
    %1708 = vsyncpa [#allocation4], 1

</llo_original>
